<compile_context>
chip_gen: v7x
topology: tpu7x:2x2x1
jax: 0.10.0
libtpu: 0.0.40
codegen_flags: <defaults>
</compile_context>

<pallas_src>
import functools
import math

import jax
import jax.numpy as jnp
import numpy as np
from jax.experimental import pallas as pl
from jax.experimental.pallas import tpu as pltpu


def _mha_kernel(q_ref, k_ref, v_ref, mask_ref,
                wq_ref, bq_ref, wk_ref, bk_ref, wv_ref, bv_ref, wo_ref, bo_ref,
                out_ref, *, num_heads, d_k):
    """grid = (batch,).

    q_ref/k_ref/v_ref : (1, S, D)   per-batch blocks
    mask_ref          : (1, S, S)   int8 0/1 mask (0 => masked out)
    wq/wk/wv/wo_ref   : (D, D)      pre-transposed (x @ W), bf16; 1/sqrt(d_k) folded into wq
    bq/bk/bv/bo_ref   : (1, D)      f32 biases (bq pre-scaled)
    out_ref           : (1, S, D)
    """
    f32 = jnp.float32
    cdt = wq_ref.dtype                       # MXU operand dtype (bf16)

    x_q = q_ref[0].astype(cdt)               # (S, D)
    x_k = k_ref[0].astype(cdt)
    x_v = v_ref[0].astype(cdt)

    # Full-width QKV projections (hoisted out of the per-head work): MXU N-dim = D.
    qp = jnp.dot(x_q, wq_ref[...], preferred_element_type=f32) + bq_ref[...]   # (S, D)
    kp = jnp.dot(x_k, wk_ref[...], preferred_element_type=f32) + bk_ref[...]
    vp = jnp.dot(x_v, wv_ref[...], preferred_element_type=f32) + bv_ref[...]

    # masked_fill(mask == 0, -1e9): compare on the VPU, exact set-(-1e9) semantics.
    pad = mask_ref[0].astype(f32) == 0.0     # (S, S) bool
    neg = f32(-1e9)

    ctx_cols = []
    for h in range(num_heads):               # static unroll; all heads share qp/kp/vp
        lo = h * d_k
        qh = qp[:, lo:lo + d_k].astype(cdt)  # (S, d_k) bf16 MXU operands
        kh = kp[:, lo:lo + d_k].astype(cdt)
        vh = vp[:, lo:lo + d_k].astype(cdt)

        # scores[q, k] = sum_d qh[q, d] * kh[k, d]  (scale already folded into Wq/bq)
        scores = jnp.einsum('qd,kd->qk', qh, kh, preferred_element_type=f32)
        scores = jnp.where(pad, neg, scores)

        # Numerically-stable softmax over keys; f32 stats, EUP approximate reciprocal.
        m = jnp.max(scores, axis=-1, keepdims=True)
        e = jnp.exp(scores - m)
        attn = e * pl.reciprocal(jnp.sum(e, axis=-1, keepdims=True), approx=True)
        # TODO(synk): dropout(attn) omitted (eval-mode identity).

        ctx_cols.append(jnp.dot(attn.astype(cdt), vh, preferred_element_type=f32))

    # Concatenate heads once, then a single (S, D) @ (D, D) output projection.
    ctx = jnp.concatenate(ctx_cols, axis=-1).astype(cdt)                        # (S, D)
    out = jnp.dot(ctx, wo_ref[...], preferred_element_type=f32) + bo_ref[...]
    out_ref[0] = out.astype(out_ref.dtype)


def multi_head_attention(q, k, v, mask, params, *, num_heads,
                         compute_dtype=jnp.bfloat16):
    B, S, D = q.shape
    assert D % num_heads == 0
    d_k = D // num_heads
    wq, bq, wk, bk, wv, bv, wo, bo = params
    scale = 1.0 / math.sqrt(d_k)
    f32 = jnp.float32

    # nn.Linear computes y = x @ W.T + b; pre-transpose once so the kernel does x @ W.
    # Weights go to the MXU operand dtype; biases stay f32 (added to f32 accumulators).
    wq_t = (wq.T * scale).astype(compute_dtype)     # fold 1/sqrt(d_k) into the Q projection
    bq_s = (bq * scale).astype(f32)
    wk_t = wk.T.astype(compute_dtype)
    wv_t = wv.T.astype(compute_dtype)
    wo_t = wo.T.astype(compute_dtype)
    bk_f = bk.astype(f32)
    bv_f = bv.astype(f32)
    bo_f = bo.astype(f32)

    # int8 0/1 mask: 4x fewer HBM/VMEM bytes than a materialized f32 -1e9 bias.
    mask_i8 = (mask != 0).astype(jnp.int8)          # (B, S, S)

    seq_spec  = pl.BlockSpec((1, S, D), lambda b: (b, 0, 0))
    mask_spec = pl.BlockSpec((1, S, S), lambda b: (b, 0, 0))
    w_spec    = pl.BlockSpec((D, D),    lambda b: (0, 0))   # constant index: DMA'd once
    bias_spec = pl.BlockSpec((1, D),    lambda b: (0, 0))

    # Explicit VMEM budget (review: set vmem_limit_bytes per generation instead of relying
    # on the default scoped limit).
    itm = jnp.dtype(q.dtype).itemsize
    cit = jnp.dtype(compute_dtype).itemsize
    est = 2 * (4 * S * D * itm + S * S)             # double-buffered q/k/v/out + int8 mask
    est += 2 * (4 * D * D * cit + 4 * D * 4)        # weights + biases
    est += 4 * S * D * 4 + 2 * S * S * 4            # in-kernel temporaries (proj, ctx, scores)
    vmem_limit = int(min(max(2 * est, 32 * 1024 * 1024), 100 * 1024 * 1024))

    kernel = functools.partial(_mha_kernel, num_heads=num_heads, d_k=d_k)

    return pl.pallas_call(
        kernel,
        out_shape=jax.ShapeDtypeStruct((B, S, D), q.dtype),
        grid_spec=pltpu.PrefetchScalarGridSpec(
            num_scalar_prefetch=0,
            grid=(B,),
            in_specs=[seq_spec, seq_spec, seq_spec, mask_spec,
                      w_spec, bias_spec, w_spec, bias_spec,
                      w_spec, bias_spec, w_spec, bias_spec],
            out_specs=seq_spec,
        ),
        compiler_params=pltpu.CompilerParams(
            dimension_semantics=("parallel",),
            vmem_limit_bytes=vmem_limit),
    )(q, k, v, mask_i8, wq_t, bq_s, wk_t, bk_f, wv_t, bv_f, wo_t, bo_f)


def _init_linear(key, d_model):
    """Deterministic nn.Linear-style init: U(-1/sqrt(in), 1/sqrt(in))."""
    kw, kb = jax.random.split(key)
    bound = 1.0 / math.sqrt(d_model)
    w = jax.random.uniform(kw, (d_model, d_model), jnp.float32, -bound, bound)
    b = jax.random.uniform(kb, (1, d_model), jnp.float32, -bound, bound)
    return w, b


def _reference(q, k, v, mask, params, num_heads):
    """Pure-JAX f32 mirror of the PyTorch forward (eval mode)."""
    wq, bq, wk, bk, wv, bv, wo, bo = params
    B, S, D = q.shape
    d_k = D // num_heads

    def proj(x, w, b):
        y = x @ w.T + b[0]
        return y.reshape(B, S, num_heads, d_k).transpose(0, 2, 1, 3)        # (B, H, S, d_k)

    qh, kh, vh = proj(q, wq, bq), proj(k, wk, bk), proj(v, wv, bv)
    scores = jnp.einsum("bhqd,bhkd->bhqk", qh, kh) / math.sqrt(d_k)
    scores = jnp.where(mask[:, None, :, :] == 0, -1e9, scores)
    attn = jax.nn.softmax(scores, axis=-1)
    ctx = jnp.einsum("bhqk,bhkd->bhqd", attn, vh)
    ctx = ctx.transpose(0, 2, 1, 3).reshape(B, S, D)
    return ctx @ wo.T + bo[0]


if __name__ == "__main__":
    B, S, H, D = 2, 8, 8, 32          # small shapes: d_model=32, heads=8 -> d_k=4

    root = jax.random.PRNGKey(0)
    k_q, k_k, k_v, k_m, k_wq, k_wk, k_wv, k_wo = jax.random.split(root, 8)

    q = jax.random.normal(k_q, (B, S, D), jnp.float32)
    k = jax.random.normal(k_k, (B, S, D), jnp.float32)
    v = jax.random.normal(k_v, (B, S, D), jnp.float32)
    # random 0/1 mask over (query, key) positions, broadcast over heads
    mask = (jax.random.uniform(k_m, (B, S, S)) > 0.2).astype(jnp.float32)

    params = (*_init_linear(k_wq, D), *_init_linear(k_wk, D),
              *_init_linear(k_wv, D), *_init_linear(k_wo, D))

    out = multi_head_attention(q, k, v, mask, params, num_heads=H)
    out = jax.block_until_ready(out)

    ref = _reference(q, k, v, mask, params, H)
    # Tolerance reflects bf16 MXU operands (standard flash-attention-style p/ctx casts,
    # f32 accumulation) plus the EUP approximate reciprocal in the softmax denominator.
    np.testing.assert_allclose(np.asarray(out), np.asarray(ref), rtol=3e-2, atol=3e-2)

    print("KERNEL_OK")
</pallas_src>

<mosaic_0001>
module attributes {stable_mosaic.version = 11 : i64} {
  func.func @_mha_kernel(%arg0: i32, %arg1: memref<1x8x32xf32, #tpu.memory_space<vmem>>, %arg2: memref<1x8x32xf32, #tpu.memory_space<vmem>>, %arg3: memref<1x8x32xf32, #tpu.memory_space<vmem>>, %arg4: memref<1x8x8xi8, #tpu.memory_space<vmem>>, %arg5: memref<32x32xbf16, #tpu.memory_space<vmem>>, %arg6: memref<1x32xf32, #tpu.memory_space<vmem>>, %arg7: memref<32x32xbf16, #tpu.memory_space<vmem>>, %arg8: memref<1x32xf32, #tpu.memory_space<vmem>>, %arg9: memref<32x32xbf16, #tpu.memory_space<vmem>>, %arg10: memref<1x32xf32, #tpu.memory_space<vmem>>, %arg11: memref<32x32xbf16, #tpu.memory_space<vmem>>, %arg12: memref<1x32xf32, #tpu.memory_space<vmem>>, %arg13: memref<1x8x32xf32, #tpu.memory_space<vmem>>) attributes {dimension_semantics = [#tpu.dimension_semantics<parallel>], iteration_bounds = array<i64: 2>, scalar_prefetch = 0 : i64, scratch_operands = 0 : i64, tpu.core_type = #tpu.core_type<tc>, window_params = [{transform_indices = @transform_0, window_bounds = array<i64: 1, 8, 32>}, {transform_indices = @transform_1, window_bounds = array<i64: 1, 8, 32>}, {transform_indices = @transform_2, window_bounds = array<i64: 1, 8, 32>}, {transform_indices = @transform_3, window_bounds = array<i64: 1, 8, 8>}, {pipeline_mode = #tpu.pipeline_mode<synchronous>, transform_indices = @transform_4, window_bounds = array<i64: 32, 32>}, {pipeline_mode = #tpu.pipeline_mode<synchronous>, transform_indices = @transform_5, window_bounds = array<i64: 1, 32>}, {pipeline_mode = #tpu.pipeline_mode<synchronous>, transform_indices = @transform_6, window_bounds = array<i64: 32, 32>}, {pipeline_mode = #tpu.pipeline_mode<synchronous>, transform_indices = @transform_7, window_bounds = array<i64: 1, 32>}, {pipeline_mode = #tpu.pipeline_mode<synchronous>, transform_indices = @transform_8, window_bounds = array<i64: 32, 32>}, {pipeline_mode = #tpu.pipeline_mode<synchronous>, transform_indices = @transform_9, window_bounds = array<i64: 1, 32>}, {pipeline_mode = #tpu.pipeline_mode<synchronous>, transform_indices = @transform_10, window_bounds = array<i64: 32, 32>}, {pipeline_mode = #tpu.pipeline_mode<synchronous>, transform_indices = @transform_11, window_bounds = array<i64: 1, 32>}, {transform_indices = @transform_12, window_bounds = array<i64: 1, 8, 32>}]} {
    %c0 = arith.constant 0 : index
    %c0_0 = arith.constant 0 : index
    %c0_1 = arith.constant 0 : index
    %0 = vector.load %arg1[%c0, %c0_0, %c0_1] : memref<1x8x32xf32, #tpu.memory_space<vmem>>, vector<1x8x32xf32>
    %1 = vector.shape_cast %0 : vector<1x8x32xf32> to vector<8x32xf32>
    %2 = arith.truncf %1 : vector<8x32xf32> to vector<8x32xbf16>
    %c0_2 = arith.constant 0 : index
    %c0_3 = arith.constant 0 : index
    %c0_4 = arith.constant 0 : index
    %3 = vector.load %arg2[%c0_2, %c0_3, %c0_4] : memref<1x8x32xf32, #tpu.memory_space<vmem>>, vector<1x8x32xf32>
    %4 = vector.shape_cast %3 : vector<1x8x32xf32> to vector<8x32xf32>
    %5 = arith.truncf %4 : vector<8x32xf32> to vector<8x32xbf16>
    %c0_5 = arith.constant 0 : index
    %c0_6 = arith.constant 0 : index
    %c0_7 = arith.constant 0 : index
    %6 = vector.load %arg3[%c0_5, %c0_6, %c0_7] : memref<1x8x32xf32, #tpu.memory_space<vmem>>, vector<1x8x32xf32>
    %7 = vector.shape_cast %6 : vector<1x8x32xf32> to vector<8x32xf32>
    %8 = arith.truncf %7 : vector<8x32xf32> to vector<8x32xbf16>
    %c0_8 = arith.constant 0 : index
    %c0_9 = arith.constant 0 : index
    %9 = vector.load %arg5[%c0_8, %c0_9] : memref<32x32xbf16, #tpu.memory_space<vmem>>, vector<32x32xbf16>
    %cst = arith.constant dense<0.000000e+00> : vector<8x32xf32>
    %10 = tpu.matmul %2, %9, %cst {dimension_numbers = #tpu.dot_dimension_numbers<[1], [0], [0], [1], [0, 0, 1, 1], [], []>} : vector<8x32xbf16>, vector<32x32xbf16>, vector<8x32xf32> -> vector<8x32xf32>
    %c0_10 = arith.constant 0 : index
    %c0_11 = arith.constant 0 : index
    %11 = vector.load %arg6[%c0_10, %c0_11] : memref<1x32xf32, #tpu.memory_space<vmem>>, vector<1x32xf32>
    %12 = vector.broadcast %11 : vector<1x32xf32> to vector<8x32xf32>
    %13 = arith.addf %10, %12 : vector<8x32xf32>
    %c0_12 = arith.constant 0 : index
    %c0_13 = arith.constant 0 : index
    %14 = vector.load %arg7[%c0_12, %c0_13] : memref<32x32xbf16, #tpu.memory_space<vmem>>, vector<32x32xbf16>
    %cst_14 = arith.constant dense<0.000000e+00> : vector<8x32xf32>
    %15 = tpu.matmul %5, %14, %cst_14 {dimension_numbers = #tpu.dot_dimension_numbers<[1], [0], [0], [1], [0, 0, 1, 1], [], []>} : vector<8x32xbf16>, vector<32x32xbf16>, vector<8x32xf32> -> vector<8x32xf32>
    %c0_15 = arith.constant 0 : index
    %c0_16 = arith.constant 0 : index
    %16 = vector.load %arg8[%c0_15, %c0_16] : memref<1x32xf32, #tpu.memory_space<vmem>>, vector<1x32xf32>
    %17 = vector.broadcast %16 : vector<1x32xf32> to vector<8x32xf32>
    %18 = arith.addf %15, %17 : vector<8x32xf32>
    %c0_17 = arith.constant 0 : index
    %c0_18 = arith.constant 0 : index
    %19 = vector.load %arg9[%c0_17, %c0_18] : memref<32x32xbf16, #tpu.memory_space<vmem>>, vector<32x32xbf16>
    %cst_19 = arith.constant dense<0.000000e+00> : vector<8x32xf32>
    %20 = tpu.matmul %8, %19, %cst_19 {dimension_numbers = #tpu.dot_dimension_numbers<[1], [0], [0], [1], [0, 0, 1, 1], [], []>} : vector<8x32xbf16>, vector<32x32xbf16>, vector<8x32xf32> -> vector<8x32xf32>
    %c0_20 = arith.constant 0 : index
    %c0_21 = arith.constant 0 : index
    %21 = vector.load %arg10[%c0_20, %c0_21] : memref<1x32xf32, #tpu.memory_space<vmem>>, vector<1x32xf32>
    %22 = vector.broadcast %21 : vector<1x32xf32> to vector<8x32xf32>
    %23 = arith.addf %20, %22 : vector<8x32xf32>
    %c0_22 = arith.constant 0 : index
    %c0_23 = arith.constant 0 : index
    %c0_24 = arith.constant 0 : index
    %24 = vector.load %arg4[%c0_22, %c0_23, %c0_24] : memref<1x8x8xi8, #tpu.memory_space<vmem>>, vector<1x8x8xi8>
    %25 = vector.shape_cast %24 : vector<1x8x8xi8> to vector<8x8xi8>
    %26 = arith.sitofp %25 : vector<8x8xi8> to vector<8x8xf32>
    %cst_25 = arith.constant 0.000000e+00 : f32
    %27 = vector.broadcast %cst_25 : f32 to vector<8x8xf32>
    %28 = arith.cmpf oeq, %26, %27 : vector<8x8xf32>
    %29 = vector.extract_strided_slice %13 {offsets = [0, 0], sizes = [8, 4], strides = [1, 1]} : vector<8x32xf32> to vector<8x4xf32>
    %30 = arith.truncf %29 : vector<8x4xf32> to vector<8x4xbf16>
    %31 = vector.extract_strided_slice %18 {offsets = [0, 0], sizes = [8, 4], strides = [1, 1]} : vector<8x32xf32> to vector<8x4xf32>
    %32 = arith.truncf %31 : vector<8x4xf32> to vector<8x4xbf16>
    %33 = vector.extract_strided_slice %23 {offsets = [0, 0], sizes = [8, 4], strides = [1, 1]} : vector<8x32xf32> to vector<8x4xf32>
    %34 = arith.truncf %33 : vector<8x4xf32> to vector<8x4xbf16>
    "tpu.trace_start"() <{level = 10 : i32, message = "qd,kd->qk"}> : () -> ()
    %cst_26 = arith.constant dense<0.000000e+00> : vector<8x8xf32>
    %35 = tpu.matmul %30, %32, %cst_26 {dimension_numbers = #tpu.dot_dimension_numbers<[1], [1], [0], [0], [0, 0, 1, 0], [], []>} : vector<8x4xbf16>, vector<8x4xbf16>, vector<8x8xf32> -> vector<8x8xf32>
    %cst_27 = arith.constant -1.000000e+09 : f32
    "tpu.trace_stop"() : () -> ()
    %36 = vector.broadcast %cst_27 : f32 to vector<8x8xf32>
    %37 = arith.select %28, %36, %35 : vector<8x8xi1>, vector<8x8xf32>
    %cst_28 = arith.constant dense<0xFF800000> : vector<8xf32>
    %38 = vector.multi_reduction <maximumf>, %37, %cst_28 [1] : vector<8x8xf32> to vector<8xf32>
    %39 = vector.shape_cast %38 : vector<8xf32> to vector<8x1xf32>
    %40 = vector.broadcast %39 : vector<8x1xf32> to vector<8x8xf32>
    %41 = arith.subf %37, %40 : vector<8x8xf32>
    %42 = math.exp %41 : vector<8x8xf32>
    %cst_29 = arith.constant dense<0.000000e+00> : vector<8xf32>
    %43 = vector.multi_reduction <add>, %42, %cst_29 [1] : vector<8x8xf32> to vector<8xf32>
    %44 = vector.shape_cast %43 : vector<8xf32> to vector<8x1xf32>
    %45 = tpu.reciprocal %44 {approx = true} : vector<8x1xf32> -> vector<8x1xf32>
    %46 = vector.broadcast %45 : vector<8x1xf32> to vector<8x8xf32>
    %47 = arith.mulf %42, %46 : vector<8x8xf32>
    %48 = arith.truncf %47 : vector<8x8xf32> to vector<8x8xbf16>
    %cst_30 = arith.constant dense<0.000000e+00> : vector<8x4xf32>
    %49 = tpu.matmul %48, %34, %cst_30 {dimension_numbers = #tpu.dot_dimension_numbers<[1], [0], [0], [1], [0, 0, 1, 1], [], []>} : vector<8x8xbf16>, vector<8x4xbf16>, vector<8x4xf32> -> vector<8x4xf32>
    %50 = vector.extract_strided_slice %13 {offsets = [0, 4], sizes = [8, 4], strides = [1, 1]} : vector<8x32xf32> to vector<8x4xf32>
    %51 = arith.truncf %50 : vector<8x4xf32> to vector<8x4xbf16>
    %52 = vector.extract_strided_slice %18 {offsets = [0, 4], sizes = [8, 4], strides = [1, 1]} : vector<8x32xf32> to vector<8x4xf32>
    %53 = arith.truncf %52 : vector<8x4xf32> to vector<8x4xbf16>
    %54 = vector.extract_strided_slice %23 {offsets = [0, 4], sizes = [8, 4], strides = [1, 1]} : vector<8x32xf32> to vector<8x4xf32>
    %55 = arith.truncf %54 : vector<8x4xf32> to vector<8x4xbf16>
    "tpu.trace_start"() <{level = 10 : i32, message = "qd,kd->qk"}> : () -> ()
    %cst_31 = arith.constant dense<0.000000e+00> : vector<8x8xf32>
    %56 = tpu.matmul %51, %53, %cst_31 {dimension_numbers = #tpu.dot_dimension_numbers<[1], [1], [0], [0], [0, 0, 1, 0], [], []>} : vector<8x4xbf16>, vector<8x4xbf16>, vector<8x8xf32> -> vector<8x8xf32>
    %cst_32 = arith.constant -1.000000e+09 : f32
    "tpu.trace_stop"() : () -> ()
    %57 = vector.broadcast %cst_32 : f32 to vector<8x8xf32>
    %58 = arith.select %28, %57, %56 : vector<8x8xi1>, vector<8x8xf32>
    %cst_33 = arith.constant dense<0xFF800000> : vector<8xf32>
    %59 = vector.multi_reduction <maximumf>, %58, %cst_33 [1] : vector<8x8xf32> to vector<8xf32>
    %60 = vector.shape_cast %59 : vector<8xf32> to vector<8x1xf32>
    %61 = vector.broadcast %60 : vector<8x1xf32> to vector<8x8xf32>
    %62 = arith.subf %58, %61 : vector<8x8xf32>
    %63 = math.exp %62 : vector<8x8xf32>
    %cst_34 = arith.constant dense<0.000000e+00> : vector<8xf32>
    %64 = vector.multi_reduction <add>, %63, %cst_34 [1] : vector<8x8xf32> to vector<8xf32>
    %65 = vector.shape_cast %64 : vector<8xf32> to vector<8x1xf32>
    %66 = tpu.reciprocal %65 {approx = true} : vector<8x1xf32> -> vector<8x1xf32>
    %67 = vector.broadcast %66 : vector<8x1xf32> to vector<8x8xf32>
    %68 = arith.mulf %63, %67 : vector<8x8xf32>
    %69 = arith.truncf %68 : vector<8x8xf32> to vector<8x8xbf16>
    %cst_35 = arith.constant dense<0.000000e+00> : vector<8x4xf32>
    %70 = tpu.matmul %69, %55, %cst_35 {dimension_numbers = #tpu.dot_dimension_numbers<[1], [0], [0], [1], [0, 0, 1, 1], [], []>} : vector<8x8xbf16>, vector<8x4xbf16>, vector<8x4xf32> -> vector<8x4xf32>
    %71 = vector.extract_strided_slice %13 {offsets = [0, 8], sizes = [8, 4], strides = [1, 1]} : vector<8x32xf32> to vector<8x4xf32>
    %72 = arith.truncf %71 : vector<8x4xf32> to vector<8x4xbf16>
    %73 = vector.extract_strided_slice %18 {offsets = [0, 8], sizes = [8, 4], strides = [1, 1]} : vector<8x32xf32> to vector<8x4xf32>
    %74 = arith.truncf %73 : vector<8x4xf32> to vector<8x4xbf16>
    %75 = vector.extract_strided_slice %23 {offsets = [0, 8], sizes = [8, 4], strides = [1, 1]} : vector<8x32xf32> to vector<8x4xf32>
    %76 = arith.truncf %75 : vector<8x4xf32> to vector<8x4xbf16>
    "tpu.trace_start"() <{level = 10 : i32, message = "qd,kd->qk"}> : () -> ()
    %cst_36 = arith.constant dense<0.000000e+00> : vector<8x8xf32>
    %77 = tpu.matmul %72, %74, %cst_36 {dimension_numbers = #tpu.dot_dimension_numbers<[1], [1], [0], [0], [0, 0, 1, 0], [], []>} : vector<8x4xbf16>, vector<8x4xbf16>, vector<8x8xf32> -> vector<8x8xf32>
    %cst_37 = arith.constant -1.000000e+09 : f32
    "tpu.trace_stop"() : () -> ()
    %78 = vector.broadcast %cst_37 : f32 to vector<8x8xf32>
    %79 = arith.select %28, %78, %77 : vector<8x8xi1>, vector<8x8xf32>
    %cst_38 = arith.constant dense<0xFF800000> : vector<8xf32>
    %80 = vector.multi_reduction <maximumf>, %79, %cst_38 [1] : vector<8x8xf32> to vector<8xf32>
    %81 = vector.shape_cast %80 : vector<8xf32> to vector<8x1xf32>
    %82 = vector.broadcast %81 : vector<8x1xf32> to vector<8x8xf32>
    %83 = arith.subf %79, %82 : vector<8x8xf32>
    %84 = math.exp %83 : vector<8x8xf32>
    %cst_39 = arith.constant dense<0.000000e+00> : vector<8xf32>
    %85 = vector.multi_reduction <add>, %84, %cst_39 [1] : vector<8x8xf32> to vector<8xf32>
    %86 = vector.shape_cast %85 : vector<8xf32> to vector<8x1xf32>
    %87 = tpu.reciprocal %86 {approx = true} : vector<8x1xf32> -> vector<8x1xf32>
    %88 = vector.broadcast %87 : vector<8x1xf32> to vector<8x8xf32>
    %89 = arith.mulf %84, %88 : vector<8x8xf32>
    %90 = arith.truncf %89 : vector<8x8xf32> to vector<8x8xbf16>
    %cst_40 = arith.constant dense<0.000000e+00> : vector<8x4xf32>
    %91 = tpu.matmul %90, %76, %cst_40 {dimension_numbers = #tpu.dot_dimension_numbers<[1], [0], [0], [1], [0, 0, 1, 1], [], []>} : vector<8x8xbf16>, vector<8x4xbf16>, vector<8x4xf32> -> vector<8x4xf32>
    %92 = vector.extract_strided_slice %13 {offsets = [0, 12], sizes = [8, 4], strides = [1, 1]} : vector<8x32xf32> to vector<8x4xf32>
    %93 = arith.truncf %92 : vector<8x4xf32> to vector<8x4xbf16>
    %94 = vector.extract_strided_slice %18 {offsets = [0, 12], sizes = [8, 4], strides = [1, 1]} : vector<8x32xf32> to vector<8x4xf32>
    %95 = arith.truncf %94 : vector<8x4xf32> to vector<8x4xbf16>
    %96 = vector.extract_strided_slice %23 {offsets = [0, 12], sizes = [8, 4], strides = [1, 1]} : vector<8x32xf32> to vector<8x4xf32>
    %97 = arith.truncf %96 : vector<8x4xf32> to vector<8x4xbf16>
    "tpu.trace_start"() <{level = 10 : i32, message = "qd,kd->qk"}> : () -> ()
    %cst_41 = arith.constant dense<0.000000e+00> : vector<8x8xf32>
    %98 = tpu.matmul %93, %95, %cst_41 {dimension_numbers = #tpu.dot_dimension_numbers<[1], [1], [0], [0], [0, 0, 1, 0], [], []>} : vector<8x4xbf16>, vector<8x4xbf16>, vector<8x8xf32> -> vector<8x8xf32>
    %cst_42 = arith.constant -1.000000e+09 : f32
    "tpu.trace_stop"() : () -> ()
    %99 = vector.broadcast %cst_42 : f32 to vector<8x8xf32>
    %100 = arith.select %28, %99, %98 : vector<8x8xi1>, vector<8x8xf32>
    %cst_43 = arith.constant dense<0xFF800000> : vector<8xf32>
    %101 = vector.multi_reduction <maximumf>, %100, %cst_43 [1] : vector<8x8xf32> to vector<8xf32>
    %102 = vector.shape_cast %101 : vector<8xf32> to vector<8x1xf32>
    %103 = vector.broadcast %102 : vector<8x1xf32> to vector<8x8xf32>
    %104 = arith.subf %100, %103 : vector<8x8xf32>
    %105 = math.exp %104 : vector<8x8xf32>
    %cst_44 = arith.constant dense<0.000000e+00> : vector<8xf32>
    %106 = vector.multi_reduction <add>, %105, %cst_44 [1] : vector<8x8xf32> to vector<8xf32>
    %107 = vector.shape_cast %106 : vector<8xf32> to vector<8x1xf32>
    %108 = tpu.reciprocal %107 {approx = true} : vector<8x1xf32> -> vector<8x1xf32>
    %109 = vector.broadcast %108 : vector<8x1xf32> to vector<8x8xf32>
    %110 = arith.mulf %105, %109 : vector<8x8xf32>
    %111 = arith.truncf %110 : vector<8x8xf32> to vector<8x8xbf16>
    %cst_45 = arith.constant dense<0.000000e+00> : vector<8x4xf32>
    %112 = tpu.matmul %111, %97, %cst_45 {dimension_numbers = #tpu.dot_dimension_numbers<[1], [0], [0], [1], [0, 0, 1, 1], [], []>} : vector<8x8xbf16>, vector<8x4xbf16>, vector<8x4xf32> -> vector<8x4xf32>
    %113 = vector.extract_strided_slice %13 {offsets = [0, 16], sizes = [8, 4], strides = [1, 1]} : vector<8x32xf32> to vector<8x4xf32>
    %114 = arith.truncf %113 : vector<8x4xf32> to vector<8x4xbf16>
    %115 = vector.extract_strided_slice %18 {offsets = [0, 16], sizes = [8, 4], strides = [1, 1]} : vector<8x32xf32> to vector<8x4xf32>
    %116 = arith.truncf %115 : vector<8x4xf32> to vector<8x4xbf16>
    %117 = vector.extract_strided_slice %23 {offsets = [0, 16], sizes = [8, 4], strides = [1, 1]} : vector<8x32xf32> to vector<8x4xf32>
    %118 = arith.truncf %117 : vector<8x4xf32> to vector<8x4xbf16>
    "tpu.trace_start"() <{level = 10 : i32, message = "qd,kd->qk"}> : () -> ()
    %cst_46 = arith.constant dense<0.000000e+00> : vector<8x8xf32>
    %119 = tpu.matmul %114, %116, %cst_46 {dimension_numbers = #tpu.dot_dimension_numbers<[1], [1], [0], [0], [0, 0, 1, 0], [], []>} : vector<8x4xbf16>, vector<8x4xbf16>, vector<8x8xf32> -> vector<8x8xf32>
    %cst_47 = arith.constant -1.000000e+09 : f32
    "tpu.trace_stop"() : () -> ()
    %120 = vector.broadcast %cst_47 : f32 to vector<8x8xf32>
    %121 = arith.select %28, %120, %119 : vector<8x8xi1>, vector<8x8xf32>
    %cst_48 = arith.constant dense<0xFF800000> : vector<8xf32>
    %122 = vector.multi_reduction <maximumf>, %121, %cst_48 [1] : vector<8x8xf32> to vector<8xf32>
    %123 = vector.shape_cast %122 : vector<8xf32> to vector<8x1xf32>
    %124 = vector.broadcast %123 : vector<8x1xf32> to vector<8x8xf32>
    %125 = arith.subf %121, %124 : vector<8x8xf32>
    %126 = math.exp %125 : vector<8x8xf32>
    %cst_49 = arith.constant dense<0.000000e+00> : vector<8xf32>
    %127 = vector.multi_reduction <add>, %126, %cst_49 [1] : vector<8x8xf32> to vector<8xf32>
    %128 = vector.shape_cast %127 : vector<8xf32> to vector<8x1xf32>
    %129 = tpu.reciprocal %128 {approx = true} : vector<8x1xf32> -> vector<8x1xf32>
    %130 = vector.broadcast %129 : vector<8x1xf32> to vector<8x8xf32>
    %131 = arith.mulf %126, %130 : vector<8x8xf32>
    %132 = arith.truncf %131 : vector<8x8xf32> to vector<8x8xbf16>
    %cst_50 = arith.constant dense<0.000000e+00> : vector<8x4xf32>
    %133 = tpu.matmul %132, %118, %cst_50 {dimension_numbers = #tpu.dot_dimension_numbers<[1], [0], [0], [1], [0, 0, 1, 1], [], []>} : vector<8x8xbf16>, vector<8x4xbf16>, vector<8x4xf32> -> vector<8x4xf32>
    %134 = vector.extract_strided_slice %13 {offsets = [0, 20], sizes = [8, 4], strides = [1, 1]} : vector<8x32xf32> to vector<8x4xf32>
    %135 = arith.truncf %134 : vector<8x4xf32> to vector<8x4xbf16>
    %136 = vector.extract_strided_slice %18 {offsets = [0, 20], sizes = [8, 4], strides = [1, 1]} : vector<8x32xf32> to vector<8x4xf32>
    %137 = arith.truncf %136 : vector<8x4xf32> to vector<8x4xbf16>
    %138 = vector.extract_strided_slice %23 {offsets = [0, 20], sizes = [8, 4], strides = [1, 1]} : vector<8x32xf32> to vector<8x4xf32>
    %139 = arith.truncf %138 : vector<8x4xf32> to vector<8x4xbf16>
    "tpu.trace_start"() <{level = 10 : i32, message = "qd,kd->qk"}> : () -> ()
    %cst_51 = arith.constant dense<0.000000e+00> : vector<8x8xf32>
    %140 = tpu.matmul %135, %137, %cst_51 {dimension_numbers = #tpu.dot_dimension_numbers<[1], [1], [0], [0], [0, 0, 1, 0], [], []>} : vector<8x4xbf16>, vector<8x4xbf16>, vector<8x8xf32> -> vector<8x8xf32>
    %cst_52 = arith.constant -1.000000e+09 : f32
    "tpu.trace_stop"() : () -> ()
    %141 = vector.broadcast %cst_52 : f32 to vector<8x8xf32>
    %142 = arith.select %28, %141, %140 : vector<8x8xi1>, vector<8x8xf32>
    %cst_53 = arith.constant dense<0xFF800000> : vector<8xf32>
    %143 = vector.multi_reduction <maximumf>, %142, %cst_53 [1] : vector<8x8xf32> to vector<8xf32>
    %144 = vector.shape_cast %143 : vector<8xf32> to vector<8x1xf32>
    %145 = vector.broadcast %144 : vector<8x1xf32> to vector<8x8xf32>
    %146 = arith.subf %142, %145 : vector<8x8xf32>
    %147 = math.exp %146 : vector<8x8xf32>
    %cst_54 = arith.constant dense<0.000000e+00> : vector<8xf32>
    %148 = vector.multi_reduction <add>, %147, %cst_54 [1] : vector<8x8xf32> to vector<8xf32>
    %149 = vector.shape_cast %148 : vector<8xf32> to vector<8x1xf32>
    %150 = tpu.reciprocal %149 {approx = true} : vector<8x1xf32> -> vector<8x1xf32>
    %151 = vector.broadcast %150 : vector<8x1xf32> to vector<8x8xf32>
    %152 = arith.mulf %147, %151 : vector<8x8xf32>
    %153 = arith.truncf %152 : vector<8x8xf32> to vector<8x8xbf16>
    %cst_55 = arith.constant dense<0.000000e+00> : vector<8x4xf32>
    %154 = tpu.matmul %153, %139, %cst_55 {dimension_numbers = #tpu.dot_dimension_numbers<[1], [0], [0], [1], [0, 0, 1, 1], [], []>} : vector<8x8xbf16>, vector<8x4xbf16>, vector<8x4xf32> -> vector<8x4xf32>
    %155 = vector.extract_strided_slice %13 {offsets = [0, 24], sizes = [8, 4], strides = [1, 1]} : vector<8x32xf32> to vector<8x4xf32>
    %156 = arith.truncf %155 : vector<8x4xf32> to vector<8x4xbf16>
    %157 = vector.extract_strided_slice %18 {offsets = [0, 24], sizes = [8, 4], strides = [1, 1]} : vector<8x32xf32> to vector<8x4xf32>
    %158 = arith.truncf %157 : vector<8x4xf32> to vector<8x4xbf16>
    %159 = vector.extract_strided_slice %23 {offsets = [0, 24], sizes = [8, 4], strides = [1, 1]} : vector<8x32xf32> to vector<8x4xf32>
    %160 = arith.truncf %159 : vector<8x4xf32> to vector<8x4xbf16>
    "tpu.trace_start"() <{level = 10 : i32, message = "qd,kd->qk"}> : () -> ()
    %cst_56 = arith.constant dense<0.000000e+00> : vector<8x8xf32>
    %161 = tpu.matmul %156, %158, %cst_56 {dimension_numbers = #tpu.dot_dimension_numbers<[1], [1], [0], [0], [0, 0, 1, 0], [], []>} : vector<8x4xbf16>, vector<8x4xbf16>, vector<8x8xf32> -> vector<8x8xf32>
    %cst_57 = arith.constant -1.000000e+09 : f32
    "tpu.trace_stop"() : () -> ()
    %162 = vector.broadcast %cst_57 : f32 to vector<8x8xf32>
    %163 = arith.select %28, %162, %161 : vector<8x8xi1>, vector<8x8xf32>
    %cst_58 = arith.constant dense<0xFF800000> : vector<8xf32>
    %164 = vector.multi_reduction <maximumf>, %163, %cst_58 [1] : vector<8x8xf32> to vector<8xf32>
    %165 = vector.shape_cast %164 : vector<8xf32> to vector<8x1xf32>
    %166 = vector.broadcast %165 : vector<8x1xf32> to vector<8x8xf32>
    %167 = arith.subf %163, %166 : vector<8x8xf32>
    %168 = math.exp %167 : vector<8x8xf32>
    %cst_59 = arith.constant dense<0.000000e+00> : vector<8xf32>
    %169 = vector.multi_reduction <add>, %168, %cst_59 [1] : vector<8x8xf32> to vector<8xf32>
    %170 = vector.shape_cast %169 : vector<8xf32> to vector<8x1xf32>
    %171 = tpu.reciprocal %170 {approx = true} : vector<8x1xf32> -> vector<8x1xf32>
    %172 = vector.broadcast %171 : vector<8x1xf32> to vector<8x8xf32>
    %173 = arith.mulf %168, %172 : vector<8x8xf32>
    %174 = arith.truncf %173 : vector<8x8xf32> to vector<8x8xbf16>
    %cst_60 = arith.constant dense<0.000000e+00> : vector<8x4xf32>
    %175 = tpu.matmul %174, %160, %cst_60 {dimension_numbers = #tpu.dot_dimension_numbers<[1], [0], [0], [1], [0, 0, 1, 1], [], []>} : vector<8x8xbf16>, vector<8x4xbf16>, vector<8x4xf32> -> vector<8x4xf32>
    %176 = vector.extract_strided_slice %13 {offsets = [0, 28], sizes = [8, 4], strides = [1, 1]} : vector<8x32xf32> to vector<8x4xf32>
    %177 = arith.truncf %176 : vector<8x4xf32> to vector<8x4xbf16>
    %178 = vector.extract_strided_slice %18 {offsets = [0, 28], sizes = [8, 4], strides = [1, 1]} : vector<8x32xf32> to vector<8x4xf32>
    %179 = arith.truncf %178 : vector<8x4xf32> to vector<8x4xbf16>
    %180 = vector.extract_strided_slice %23 {offsets = [0, 28], sizes = [8, 4], strides = [1, 1]} : vector<8x32xf32> to vector<8x4xf32>
    %181 = arith.truncf %180 : vector<8x4xf32> to vector<8x4xbf16>
    "tpu.trace_start"() <{level = 10 : i32, message = "qd,kd->qk"}> : () -> ()
    %cst_61 = arith.constant dense<0.000000e+00> : vector<8x8xf32>
    %182 = tpu.matmul %177, %179, %cst_61 {dimension_numbers = #tpu.dot_dimension_numbers<[1], [1], [0], [0], [0, 0, 1, 0], [], []>} : vector<8x4xbf16>, vector<8x4xbf16>, vector<8x8xf32> -> vector<8x8xf32>
    %cst_62 = arith.constant -1.000000e+09 : f32
    "tpu.trace_stop"() : () -> ()
    %183 = vector.broadcast %cst_62 : f32 to vector<8x8xf32>
    %184 = arith.select %28, %183, %182 : vector<8x8xi1>, vector<8x8xf32>
    %cst_63 = arith.constant dense<0xFF800000> : vector<8xf32>
    %185 = vector.multi_reduction <maximumf>, %184, %cst_63 [1] : vector<8x8xf32> to vector<8xf32>
    %186 = vector.shape_cast %185 : vector<8xf32> to vector<8x1xf32>
    %187 = vector.broadcast %186 : vector<8x1xf32> to vector<8x8xf32>
    %188 = arith.subf %184, %187 : vector<8x8xf32>
    %189 = math.exp %188 : vector<8x8xf32>
    %cst_64 = arith.constant dense<0.000000e+00> : vector<8xf32>
    %190 = vector.multi_reduction <add>, %189, %cst_64 [1] : vector<8x8xf32> to vector<8xf32>
    %191 = vector.shape_cast %190 : vector<8xf32> to vector<8x1xf32>
    %192 = tpu.reciprocal %191 {approx = true} : vector<8x1xf32> -> vector<8x1xf32>
    %193 = vector.broadcast %192 : vector<8x1xf32> to vector<8x8xf32>
    %194 = arith.mulf %189, %193 : vector<8x8xf32>
    %195 = arith.truncf %194 : vector<8x8xf32> to vector<8x8xbf16>
    %cst_65 = arith.constant dense<0.000000e+00> : vector<8x4xf32>
    %196 = tpu.matmul %195, %181, %cst_65 {dimension_numbers = #tpu.dot_dimension_numbers<[1], [0], [0], [1], [0, 0, 1, 1], [], []>} : vector<8x8xbf16>, vector<8x4xbf16>, vector<8x4xf32> -> vector<8x4xf32>
    %197 = tpu.concatenate %49, %70, %91, %112, %133, %154, %175, %196 in 1 : vector<8x4xf32>, vector<8x4xf32>, vector<8x4xf32>, vector<8x4xf32>, vector<8x4xf32>, vector<8x4xf32>, vector<8x4xf32>, vector<8x4xf32> -> vector<8x32xf32>
    %198 = arith.truncf %197 : vector<8x32xf32> to vector<8x32xbf16>
    %c0_66 = arith.constant 0 : index
    %c0_67 = arith.constant 0 : index
    %199 = vector.load %arg11[%c0_66, %c0_67] : memref<32x32xbf16, #tpu.memory_space<vmem>>, vector<32x32xbf16>
    %cst_68 = arith.constant dense<0.000000e+00> : vector<8x32xf32>
    %200 = tpu.matmul %198, %199, %cst_68 {dimension_numbers = #tpu.dot_dimension_numbers<[1], [0], [0], [1], [0, 0, 1, 1], [], []>} : vector<8x32xbf16>, vector<32x32xbf16>, vector<8x32xf32> -> vector<8x32xf32>
    %c0_69 = arith.constant 0 : index
    %c0_70 = arith.constant 0 : index
    %201 = vector.load %arg12[%c0_69, %c0_70] : memref<1x32xf32, #tpu.memory_space<vmem>>, vector<1x32xf32>
    %202 = vector.broadcast %201 : vector<1x32xf32> to vector<8x32xf32>
    %203 = arith.addf %200, %202 : vector<8x32xf32>
    %c0_71 = arith.constant 0 : index
    %c0_72 = arith.constant 0 : index
    %c0_73 = arith.constant 0 : index
    %204 = vector.load %arg13[%c0_71, %c0_72, %c0_73] : memref<1x8x32xf32, #tpu.memory_space<vmem>>, vector<1x8x32xf32>
    %205 = vector.shape_cast %204 : vector<1x8x32xf32> to vector<8x32xf32>
    %206 = vector.shape_cast %203 : vector<8x32xf32> to vector<1x8x32xf32>
    tpu.vector_store %arg13[%c0_71, %c0_72, %c0_73], %206 {strides = array<i32>} : memref<1x8x32xf32, #tpu.memory_space<vmem>>, vector<1x8x32xf32>,
    return
  }
  func.func @transform_0(%arg0: i32) -> (i32, i32, i32) {
    %c0_i32 = arith.constant 0 : i32
    %c0_i32_0 = arith.constant 0 : i32
    %c0_i32_1 = arith.constant 0 : i32
    return %arg0, %c0_i32, %c0_i32_0 : i32, i32, i32
  }
  func.func @transform_1(%arg0: i32) -> (i32, i32, i32) {
    %c0_i32 = arith.constant 0 : i32
    %c0_i32_0 = arith.constant 0 : i32
    %c0_i32_1 = arith.constant 0 : i32
    return %arg0, %c0_i32, %c0_i32_0 : i32, i32, i32
  }
  func.func @transform_2(%arg0: i32) -> (i32, i32, i32) {
    %c0_i32 = arith.constant 0 : i32
    %c0_i32_0 = arith.constant 0 : i32
    %c0_i32_1 = arith.constant 0 : i32
    return %arg0, %c0_i32, %c0_i32_0 : i32, i32, i32
  }
  func.func @transform_3(%arg0: i32) -> (i32, i32, i32) {
    %c0_i32 = arith.constant 0 : i32
    %c0_i32_0 = arith.constant 0 : i32
    %c0_i32_1 = arith.constant 0 : i32
    return %arg0, %c0_i32, %c0_i32_0 : i32, i32, i32
  }
  func.func @transform_4(%arg0: i32) -> (i32, i32) {
    %c0_i32 = arith.constant 0 : i32
    %c0_i32_0 = arith.constant 0 : i32
    %c0_i32_1 = arith.constant 0 : i32
    return %c0_i32, %c0_i32_0 : i32, i32
  }
  func.func @transform_5(%arg0: i32) -> (i32, i32) {
    %c0_i32 = arith.constant 0 : i32
    %c0_i32_0 = arith.constant 0 : i32
    %c0_i32_1 = arith.constant 0 : i32
    return %c0_i32, %c0_i32_0 : i32, i32
  }
  func.func @transform_6(%arg0: i32) -> (i32, i32) {
    %c0_i32 = arith.constant 0 : i32
    %c0_i32_0 = arith.constant 0 : i32
    %c0_i32_1 = arith.constant 0 : i32
    return %c0_i32, %c0_i32_0 : i32, i32
  }
  func.func @transform_7(%arg0: i32) -> (i32, i32) {
    %c0_i32 = arith.constant 0 : i32
    %c0_i32_0 = arith.constant 0 : i32
    %c0_i32_1 = arith.constant 0 : i32
    return %c0_i32, %c0_i32_0 : i32, i32
  }
  func.func @transform_8(%arg0: i32) -> (i32, i32) {
    %c0_i32 = arith.constant 0 : i32
    %c0_i32_0 = arith.constant 0 : i32
    %c0_i32_1 = arith.constant 0 : i32
    return %c0_i32, %c0_i32_0 : i32, i32
  }
  func.func @transform_9(%arg0: i32) -> (i32, i32) {
    %c0_i32 = arith.constant 0 : i32
    %c0_i32_0 = arith.constant 0 : i32
    %c0_i32_1 = arith.constant 0 : i32
    return %c0_i32, %c0_i32_0 : i32, i32
  }
  func.func @transform_10(%arg0: i32) -> (i32, i32) {
    %c0_i32 = arith.constant 0 : i32
    %c0_i32_0 = arith.constant 0 : i32
    %c0_i32_1 = arith.constant 0 : i32
    return %c0_i32, %c0_i32_0 : i32, i32
  }
  func.func @transform_11(%arg0: i32) -> (i32, i32) {
    %c0_i32 = arith.constant 0 : i32
    %c0_i32_0 = arith.constant 0 : i32
    %c0_i32_1 = arith.constant 0 : i32
    return %c0_i32, %c0_i32_0 : i32, i32
  }
  func.func @transform_12(%arg0: i32) -> (i32, i32, i32) {
    %c0_i32 = arith.constant 0 : i32
    %c0_i32_0 = arith.constant 0 : i32
    %c0_i32_1 = arith.constant 0 : i32
    return %arg0, %c0_i32, %c0_i32_0 : i32, i32, i32
  }
}

</mosaic_0001>

<llo_original>
// kernel: tpu_custom_call.1
$region0: #{tpu_custom_call.1}
  #allocation0 [shape = 'u32[]', space=smem, size = 0x4, offset = 0x4, fixed_abs, tag = 'smem constant byte address 0x4 - core index']
  #allocation1 [shape = 'u32[144,128]{1,0:T(1,128)}', space=vmem, size = 0x12000, scoped, tag = 'internal scratch']
  %s0 = inlined_call_operand.hbm [shape: f32[2,8,32], index: 0, kind: input, shape index: {}]
  %s1 = inlined_call_operand.hbm [shape: f32[2,8,32], index: 1, kind: input, shape index: {}]
  %s2 = inlined_call_operand.hbm [shape: f32[2,8,32], index: 2, kind: input, shape index: {}]
  %s3 = inlined_call_operand.hbm [shape: s8[2,8,8], index: 3, kind: input, shape index: {}]
  %s4 = inlined_call_operand.hbm [shape: bf16[32,32], index: 4, kind: input, shape index: {}]
  %s5 = inlined_call_operand.vmem [shape: f32[1,32], index: 5, kind: input, shape index: {}]
  %s6 = inlined_call_operand.vmem [shape: bf16[32,32], index: 6, kind: input, shape index: {}]
  %s7 = inlined_call_operand.vmem [shape: f32[1,32], index: 7, kind: input, shape index: {}]
  %s8 = inlined_call_operand.hbm [shape: bf16[32,32], index: 8, kind: input, shape index: {}]
  %s9 = inlined_call_operand.hbm [shape: f32[1,32], index: 9, kind: input, shape index: {}]
  %s10 = inlined_call_operand.vmem [shape: bf16[32,32], index: 10, kind: input, shape index: {}]
  %s11 = inlined_call_operand.vmem [shape: f32[1,32], index: 11, kind: input, shape index: {}]
  %s12 = inlined_call_operand.hbm [shape: f32[2,8,32], index: 12, kind: output, shape index: {}]
  %s13 = sld [smem:[#allocation0]]
  $region109: #{tpu_custom_call.1} parent=0
    _
  %s15 = ssub.s32 1, %s13
  %s16 = scalar_select 0, %s15, %s13
  $region1: #{tpu_custom_call.1} parent=0
    #allocation2 [shape = 'u8[8192]{0}', space=vmem, size = 0x2000, scoped, tag = 'input window, operand 0']
    #allocation3 [shape = 's32[2]{0}', space=sflag, size = 0x8, scoped, tag = 'scoped memory for tpu_custom_call.1']
    #allocation4 [shape = 's32[2]{0}', space=sflag, size = 0x8, scoped, tag = 'scoped memory for tpu_custom_call.1']
    #allocation5 [shape = 'u8[8192]{0}', space=vmem, size = 0x2000, scoped, tag = 'input window, operand 1']
    #allocation6 [shape = 's32[2]{0}', space=sflag, size = 0x8, scoped, tag = 'scoped memory for tpu_custom_call.1']
    #allocation7 [shape = 'u8[8192]{0}', space=vmem, size = 0x2000, scoped, tag = 'input window, operand 2']
    #allocation8 [shape = 'u8[2048]{0}', space=vmem, size = 0x800, scoped, tag = 'input window, operand 3']
    #allocation9 [shape = 's32[2]{0}', space=sflag, size = 0x8, scoped, tag = 'scoped memory for tpu_custom_call.1']
    #allocation10 [shape = 'u8[8192]{0}', space=vmem, size = 0x2000, scoped, tag = 'input window, operand 4, single buffered']
    #allocation11 [shape = 'u8[8192]{0}', space=vmem, size = 0x2000, scoped, tag = 'input window, operand 8, single buffered']
    #allocation12 [shape = 's32[1]{0}', space=sflag, size = 0x4, scoped, tag = 'scoped memory for tpu_custom_call.1']
    #allocation13 [shape = 'u8[512]{0}', space=vmem, size = 0x400, scoped, tag = 'input window, operand 9, single buffered']
    #allocation14 [shape = 'u8[8192]{0}', space=vmem, size = 0x2000, scoped, tag = 'output window, operand 0']
    %17 = vsyncpa [#allocation3], 0
    %s18 = scalar_lea.sflag [#allocation3], 1
    %19 = vsyncpa %s18, 0
    %20 = vsyncpa [#allocation6], 0
    %s21 = scalar_lea.sflag [#allocation6], 1
    %22 = vsyncpa %s21, 0
    %23 = vsyncpa [#allocation9], 0
    %s24 = scalar_lea.sflag [#allocation9], 1
    %25 = vsyncpa %s24, 0
    %26 = vsyncpa [#allocation12], 0
    %27 = vsyncpa [#allocation4], 0
    %s28 = scalar_lea.sflag [#allocation4], 1
    %29 = vsyncpa %s28, 0
    loop: start=0, step=1, limit=4
    $region2: #{tpu_custom_call.1} parent=1 // loop_pre_header
      _
    $region3: #{tpu_custom_call.1} parent=1 // loop_header
      %s31 = sphi 0, %s35
      %p32 = scmp.ge.s32.totalorder %s31, 4
      %s41 = sphi 0, %s43
      %s44 = sphi 0, %s41
      %s45 = sphi 0, %s44
      %s61 = sphi 0, %s45
      %s67 = sphi 0, %s69
      %s70 = sphi 0, %s67
      %s71 = sphi 0, %s70
      %s87 = sphi 0, %s71
      %s93 = sphi 0, %s95
      %s96 = sphi 0, %s93
      %s97 = sphi 0, %s96
      %s113 = sphi 0, %s97
      %s119 = sphi 0, %s121
      %s122 = sphi 0, %s119
      %s123 = sphi 0, %s122
      %s139 = sphi 0, %s123
      %s143 = sphi 0, %s143
      %s145 = sphi 0, %s143
      %s146 = sphi 0, %s145
      %s160 = sphi 0, %s146
      %s164 = sphi 0, %s164
      %s166 = sphi 0, %s164
      %s167 = sphi 0, %s166
      %s181 = sphi 0, %s167
      %s185 = sphi 0, %s185
      %s187 = sphi 0, %s185
      %s188 = sphi 0, %s187
      %s202 = sphi 0, %s188
      %s206 = sphi 0, %s206
      %s208 = sphi 0, %s206
      %s209 = sphi 0, %s208
      %s223 = sphi 0, %s209
      %s227 = sphi 0, %s227
      %s229 = sphi 0, %s227
      %s230 = sphi 0, %s229
      %s244 = sphi 0, %s230
      %s248 = sphi 0, %s248
      %s250 = sphi 0, %s248
      %s251 = sphi 0, %s250
      %s265 = sphi 0, %s251
      %s269 = sphi 0, %s269
      %s271 = sphi 0, %s269
      %s272 = sphi 0, %s271
      %s286 = sphi 0, %s272
      %s290 = sphi 0, %s290
      %s292 = sphi 0, %s290
      %s293 = sphi 0, %s292
      %s307 = sphi 0, %s293
      %s313 = sphi 0, %s315
      %s316 = sphi 0, %s313
      %s317 = sphi 0, %s316
      %s333 = sphi 0, %s317
    $region4: #{tpu_custom_call.1} parent=1 // loop_header_branch
      %34 = sbr.rel (%p32) target = $region8
    $region5: #{tpu_custom_call.1} parent=1 // loop_body
      %s36 = ssub.s32 %s31, 1
      %s37 = ssub.s32 %s31, 2
      %s38 = sadd.s32 %s31, 1
      %s39 = ssub.s32 %s31, %s38
      %p40 = scmp.eq.s32.totalorder %s39, 0
      %s42 = sadd.s32 %s41, 1
      %s43 = scalar_select %p40, %s41, %s42
      %p46 = pneg %p40
      %p47 = scmp.eq.s32.totalorder %s31, 1
      %p48 = por %p46, %p47
      %p49 = scmp.ne.s32.totalorder %s41, %s44
      %p50 = scmp.eq.s32.totalorder %s31, 0
      %p51 = por %p49, %p50
      %p52 = scmp.ne.s32.totalorder %s41, %s44
      %p53 = scmp.eq.s32.totalorder %s36, 1
      %p54 = por %p52, %p53
      %p55 = scmp.ne.s32.totalorder %s44, %s45
      %p56 = scmp.eq.s32.totalorder %s36, 0
      %p57 = por %p55, %p56
      %p58 = scmp.ne.s32.totalorder %s44, %s45
      %p59 = scmp.eq.s32.totalorder %s37, 1
      %p60 = por %p58, %p59
      %p62 = scmp.ne.s32.totalorder %s45, %s61
      %p63 = scmp.eq.s32.totalorder %s37, 0
      %p64 = por %p62, %p63
      %s65 = ssub.s32 %s31, %s38
      %p66 = scmp.eq.s32.totalorder %s65, 0
      %s68 = sadd.s32 %s67, 1
      %s69 = scalar_select %p66, %s67, %s68
      %p72 = pneg %p66
      %p73 = scmp.eq.s32.totalorder %s31, 1
      %p74 = por %p72, %p73
      %p75 = scmp.ne.s32.totalorder %s67, %s70
      %p76 = scmp.eq.s32.totalorder %s31, 0
      %p77 = por %p75, %p76
      %p78 = scmp.ne.s32.totalorder %s67, %s70
      %p79 = scmp.eq.s32.totalorder %s36, 1
      %p80 = por %p78, %p79
      %p81 = scmp.ne.s32.totalorder %s70, %s71
      %p82 = scmp.eq.s32.totalorder %s36, 0
      %p83 = por %p81, %p82
      %p84 = scmp.ne.s32.totalorder %s70, %s71
      %p85 = scmp.eq.s32.totalorder %s37, 1
      %p86 = por %p84, %p85
      %p88 = scmp.ne.s32.totalorder %s71, %s87
      %p89 = scmp.eq.s32.totalorder %s37, 0
      %p90 = por %p88, %p89
      %s91 = ssub.s32 %s31, %s38
      %p92 = scmp.eq.s32.totalorder %s91, 0
      %s94 = sadd.s32 %s93, 1
      %s95 = scalar_select %p92, %s93, %s94
      %p98 = pneg %p92
      %p99 = scmp.eq.s32.totalorder %s31, 1
      %p100 = por %p98, %p99
      %p101 = scmp.ne.s32.totalorder %s93, %s96
      %p102 = scmp.eq.s32.totalorder %s31, 0
      %p103 = por %p101, %p102
      %p104 = scmp.ne.s32.totalorder %s93, %s96
      %p105 = scmp.eq.s32.totalorder %s36, 1
      %p106 = por %p104, %p105
      %p107 = scmp.ne.s32.totalorder %s96, %s97
      %p108 = scmp.eq.s32.totalorder %s36, 0
      %p109 = por %p107, %p108
      %p110 = scmp.ne.s32.totalorder %s96, %s97
      %p111 = scmp.eq.s32.totalorder %s37, 1
      %p112 = por %p110, %p111
      %p114 = scmp.ne.s32.totalorder %s97, %s113
      %p115 = scmp.eq.s32.totalorder %s37, 0
      %p116 = por %p114, %p115
      %s117 = ssub.s32 %s31, %s38
      %p118 = scmp.eq.s32.totalorder %s117, 0
      %s120 = sadd.s32 %s119, 1
      %s121 = scalar_select %p118, %s119, %s120
      %p124 = pneg %p118
      %p125 = scmp.eq.s32.totalorder %s31, 1
      %p126 = por %p124, %p125
      %p127 = scmp.ne.s32.totalorder %s119, %s122
      %p128 = scmp.eq.s32.totalorder %s31, 0
      %p129 = por %p127, %p128
      %p130 = scmp.ne.s32.totalorder %s119, %s122
      %p131 = scmp.eq.s32.totalorder %s36, 1
      %p132 = por %p130, %p131
      %p133 = scmp.ne.s32.totalorder %s122, %s123
      %p134 = scmp.eq.s32.totalorder %s36, 0
      %p135 = por %p133, %p134
      %p136 = scmp.ne.s32.totalorder %s122, %s123
      %p137 = scmp.eq.s32.totalorder %s37, 1
      %p138 = por %p136, %p137
      %p140 = scmp.ne.s32.totalorder %s123, %s139
      %p141 = scmp.eq.s32.totalorder %s37, 0
      %p142 = por %p140, %p141
      %s144 = sadd.s32 %s143, 1
      %p147 = scmp.eq.s32.totalorder %s31, 1
      %p148 = scmp.ne.s32.totalorder %s143, %s145
      %p149 = scmp.eq.s32.totalorder %s31, 0
      %p150 = por %p148, %p149
      %p151 = scmp.ne.s32.totalorder %s143, %s145
      %p152 = scmp.eq.s32.totalorder %s36, 1
      %p153 = por %p151, %p152
      %p154 = scmp.ne.s32.totalorder %s145, %s146
      %p155 = scmp.eq.s32.totalorder %s36, 0
      %p156 = por %p154, %p155
      %p157 = scmp.ne.s32.totalorder %s145, %s146
      %p158 = scmp.eq.s32.totalorder %s37, 1
      %p159 = por %p157, %p158
      %p161 = scmp.ne.s32.totalorder %s146, %s160
      %p162 = scmp.eq.s32.totalorder %s37, 0
      %p163 = por %p161, %p162
      %s165 = sadd.s32 %s164, 1
      %p168 = scmp.eq.s32.totalorder %s31, 1
      %p169 = scmp.ne.s32.totalorder %s164, %s166
      %p170 = scmp.eq.s32.totalorder %s31, 0
      %p171 = por %p169, %p170
      %p172 = scmp.ne.s32.totalorder %s164, %s166
      %p173 = scmp.eq.s32.totalorder %s36, 1
      %p174 = por %p172, %p173
      %p175 = scmp.ne.s32.totalorder %s166, %s167
      %p176 = scmp.eq.s32.totalorder %s36, 0
      %p177 = por %p175, %p176
      %p178 = scmp.ne.s32.totalorder %s166, %s167
      %p179 = scmp.eq.s32.totalorder %s37, 1
      %p180 = por %p178, %p179
      %p182 = scmp.ne.s32.totalorder %s167, %s181
      %p183 = scmp.eq.s32.totalorder %s37, 0
      %p184 = por %p182, %p183
      %s186 = sadd.s32 %s185, 1
      %p189 = scmp.eq.s32.totalorder %s31, 1
      %p190 = scmp.ne.s32.totalorder %s185, %s187
      %p191 = scmp.eq.s32.totalorder %s31, 0
      %p192 = por %p190, %p191
      %p193 = scmp.ne.s32.totalorder %s185, %s187
      %p194 = scmp.eq.s32.totalorder %s36, 1
      %p195 = por %p193, %p194
      %p196 = scmp.ne.s32.totalorder %s187, %s188
      %p197 = scmp.eq.s32.totalorder %s36, 0
      %p198 = por %p196, %p197
      %p199 = scmp.ne.s32.totalorder %s187, %s188
      %p200 = scmp.eq.s32.totalorder %s37, 1
      %p201 = por %p199, %p200
      %p203 = scmp.ne.s32.totalorder %s188, %s202
      %p204 = scmp.eq.s32.totalorder %s37, 0
      %p205 = por %p203, %p204
      %s207 = sadd.s32 %s206, 1
      %p210 = scmp.eq.s32.totalorder %s31, 1
      %p211 = scmp.ne.s32.totalorder %s206, %s208
      %p212 = scmp.eq.s32.totalorder %s31, 0
      %p213 = por %p211, %p212
      %p214 = scmp.ne.s32.totalorder %s206, %s208
      %p215 = scmp.eq.s32.totalorder %s36, 1
      %p216 = por %p214, %p215
      %p217 = scmp.ne.s32.totalorder %s208, %s209
      %p218 = scmp.eq.s32.totalorder %s36, 0
      %p219 = por %p217, %p218
      %p220 = scmp.ne.s32.totalorder %s208, %s209
      %p221 = scmp.eq.s32.totalorder %s37, 1
      %p222 = por %p220, %p221
      %p224 = scmp.ne.s32.totalorder %s209, %s223
      %p225 = scmp.eq.s32.totalorder %s37, 0
      %p226 = por %p224, %p225
      %s228 = sadd.s32 %s227, 1
      %p231 = scmp.eq.s32.totalorder %s31, 1
      %p232 = scmp.ne.s32.totalorder %s227, %s229
      %p233 = scmp.eq.s32.totalorder %s31, 0
      %p234 = por %p232, %p233
      %p235 = scmp.ne.s32.totalorder %s227, %s229
      %p236 = scmp.eq.s32.totalorder %s36, 1
      %p237 = por %p235, %p236
      %p238 = scmp.ne.s32.totalorder %s229, %s230
      %p239 = scmp.eq.s32.totalorder %s36, 0
      %p240 = por %p238, %p239
      %p241 = scmp.ne.s32.totalorder %s229, %s230
      %p242 = scmp.eq.s32.totalorder %s37, 1
      %p243 = por %p241, %p242
      %p245 = scmp.ne.s32.totalorder %s230, %s244
      %p246 = scmp.eq.s32.totalorder %s37, 0
      %p247 = por %p245, %p246
      %s249 = sadd.s32 %s248, 1
      %p252 = scmp.eq.s32.totalorder %s31, 1
      %p253 = scmp.ne.s32.totalorder %s248, %s250
      %p254 = scmp.eq.s32.totalorder %s31, 0
      %p255 = por %p253, %p254
      %p256 = scmp.ne.s32.totalorder %s248, %s250
      %p257 = scmp.eq.s32.totalorder %s36, 1
      %p258 = por %p256, %p257
      %p259 = scmp.ne.s32.totalorder %s250, %s251
      %p260 = scmp.eq.s32.totalorder %s36, 0
      %p261 = por %p259, %p260
      %p262 = scmp.ne.s32.totalorder %s250, %s251
      %p263 = scmp.eq.s32.totalorder %s37, 1
      %p264 = por %p262, %p263
      %p266 = scmp.ne.s32.totalorder %s251, %s265
      %p267 = scmp.eq.s32.totalorder %s37, 0
      %p268 = por %p266, %p267
      %s270 = sadd.s32 %s269, 1
      %p273 = scmp.eq.s32.totalorder %s31, 1
      %p274 = scmp.ne.s32.totalorder %s269, %s271
      %p275 = scmp.eq.s32.totalorder %s31, 0
      %p276 = por %p274, %p275
      %p277 = scmp.ne.s32.totalorder %s269, %s271
      %p278 = scmp.eq.s32.totalorder %s36, 1
      %p279 = por %p277, %p278
      %p280 = scmp.ne.s32.totalorder %s271, %s272
      %p281 = scmp.eq.s32.totalorder %s36, 0
      %p282 = por %p280, %p281
      %p283 = scmp.ne.s32.totalorder %s271, %s272
      %p284 = scmp.eq.s32.totalorder %s37, 1
      %p285 = por %p283, %p284
      %p287 = scmp.ne.s32.totalorder %s272, %s286
      %p288 = scmp.eq.s32.totalorder %s37, 0
      %p289 = por %p287, %p288
      %s291 = sadd.s32 %s290, 1
      %p294 = scmp.eq.s32.totalorder %s31, 1
      %p295 = scmp.ne.s32.totalorder %s290, %s292
      %p296 = scmp.eq.s32.totalorder %s31, 0
      %p297 = por %p295, %p296
      %p298 = scmp.ne.s32.totalorder %s290, %s292
      %p299 = scmp.eq.s32.totalorder %s36, 1
      %p300 = por %p298, %p299
      %p301 = scmp.ne.s32.totalorder %s292, %s293
      %p302 = scmp.eq.s32.totalorder %s36, 0
      %p303 = por %p301, %p302
      %p304 = scmp.ne.s32.totalorder %s292, %s293
      %p305 = scmp.eq.s32.totalorder %s37, 1
      %p306 = por %p304, %p305
      %p308 = scmp.ne.s32.totalorder %s293, %s307
      %p309 = scmp.eq.s32.totalorder %s37, 0
      %p310 = por %p308, %p309
      %s311 = ssub.s32 %s31, %s38
      %p312 = scmp.eq.s32.totalorder %s311, 0
      %s314 = sadd.s32 %s313, 1
      %s315 = scalar_select %p312, %s313, %s314
      %p318 = pneg %p312
      %p319 = scmp.eq.s32.totalorder %s31, 1
      %p320 = por %p318, %p319
      %p321 = scmp.ne.s32.totalorder %s313, %s316
      %p322 = scmp.eq.s32.totalorder %s31, 0
      %p323 = por %p321, %p322
      %p324 = scmp.ne.s32.totalorder %s313, %s316
      %p325 = scmp.eq.s32.totalorder %s36, 1
      %p326 = por %p324, %p325
      %p327 = scmp.ne.s32.totalorder %s316, %s317
      %p328 = scmp.eq.s32.totalorder %s36, 0
      %p329 = por %p327, %p328
      %p330 = scmp.ne.s32.totalorder %s316, %s317
      %p331 = scmp.eq.s32.totalorder %s37, 1
      %p332 = por %p330, %p331
      %p334 = scmp.ne.s32.totalorder %s317, %s333
      %p335 = scmp.eq.s32.totalorder %s37, 0
      %p336 = por %p334, %p335
      %p337 = scmp.le.s32.totalorder 1, %s31
      %p338 = scmp.lt.s32.totalorder %s31, 3
      %p339 = pnand %p337, %p338
      %p340 = pneg %p339
      // Predicated region
      $region9: #{tpu_custom_call.1} parent=5 // pred_check
        _
      $region10: #{tpu_custom_call.1} parent=5 // pred_check_branch
        %342 = sbr.rel (%p339) target = $region12
      $region11: #{tpu_custom_call.1} parent=5 // pred_region
        %s343 = ssub.s32 %s31, 1
        // Predicated region
        $region13: #{tpu_custom_call.1} parent=11 // pred_check
          %p344 = pneg %p156
        $region14: #{tpu_custom_call.1} parent=11 // pred_check_branch
          %346 = sbr.rel (%p344) target = $region16
        $region15: #{tpu_custom_call.1} parent=11 // pred_region
          %s348 = ssub.s32 256, 256
          %349 = vsyncadd [#allocation9], %s348
          %s350 = sshll.u32 [#allocation10], 4
          %s351 = int_to_ptr.vmem [resolvable:$true] %s350
          %356 = dma.hbm_to_vmem [thread:$0]  %s4, 256, %s351, [#allocation9], 64, 64, 4
        $region16: #{tpu_custom_call.1} parent=11 // pred_fallthru
          _
        // Predicated region
        $region17: #{tpu_custom_call.1} parent=11 // pred_check
          %p357 = pneg %p177
        $region18: #{tpu_custom_call.1} parent=11 // pred_check_branch
          %359 = sbr.rel (%p357) target = $region20
        $region19: #{tpu_custom_call.1} parent=11 // pred_region
          _
        $region20: #{tpu_custom_call.1} parent=11 // pred_fallthru
          _
        // Predicated region
        $region21: #{tpu_custom_call.1} parent=11 // pred_check
          %p360 = pneg %p198
        $region22: #{tpu_custom_call.1} parent=11 // pred_check_branch
          %362 = sbr.rel (%p360) target = $region24
        $region23: #{tpu_custom_call.1} parent=11 // pred_region
          _
        $region24: #{tpu_custom_call.1} parent=11 // pred_fallthru
          _
        // Predicated region
        $region25: #{tpu_custom_call.1} parent=11 // pred_check
          %p363 = pneg %p219
        $region26: #{tpu_custom_call.1} parent=11 // pred_check_branch
          %365 = sbr.rel (%p363) target = $region28
        $region27: #{tpu_custom_call.1} parent=11 // pred_region
          _
        $region28: #{tpu_custom_call.1} parent=11 // pred_fallthru
          _
        // Predicated region
        $region29: #{tpu_custom_call.1} parent=11 // pred_check
          %p366 = pneg %p240
        $region30: #{tpu_custom_call.1} parent=11 // pred_check_branch
          %368 = sbr.rel (%p366) target = $region32
        $region31: #{tpu_custom_call.1} parent=11 // pred_region
          %s370 = ssub.s32 256, 256
          %371 = vsyncadd [#allocation12], %s370
          %s372 = sshll.u32 [#allocation11], 4
          %s373 = int_to_ptr.vmem [resolvable:$true] %s372
          %378 = dma.hbm_to_vmem [thread:$0]  %s8, 256, %s373, [#allocation12], 64, 64, 4
        $region32: #{tpu_custom_call.1} parent=11 // pred_fallthru
          _
        // Predicated region
        $region33: #{tpu_custom_call.1} parent=11 // pred_check
          %p379 = pneg %p261
        $region34: #{tpu_custom_call.1} parent=11 // pred_check_branch
          %381 = sbr.rel (%p379) target = $region36
        $region35: #{tpu_custom_call.1} parent=11 // pred_region
          %s383 = ssub.s32 16, 16
          %384 = vsyncadd [#allocation12], %s383
          %s386 = sshll.u32 [#allocation13], 4
          %s387 = int_to_ptr.vmem [resolvable:$true] %s386
          %389 = dma.hbm_to_vmem [thread:$0]  %s9, 16, %s387, [#allocation12]
        $region36: #{tpu_custom_call.1} parent=11 // pred_fallthru
          _
        // Predicated region
        $region37: #{tpu_custom_call.1} parent=11 // pred_check
          %p390 = pneg %p282
        $region38: #{tpu_custom_call.1} parent=11 // pred_check_branch
          %392 = sbr.rel (%p390) target = $region40
        $region39: #{tpu_custom_call.1} parent=11 // pred_region
          _
        $region40: #{tpu_custom_call.1} parent=11 // pred_fallthru
          _
        // Predicated region
        $region41: #{tpu_custom_call.1} parent=11 // pred_check
          %p393 = pneg %p303
        $region42: #{tpu_custom_call.1} parent=11 // pred_check_branch
          %395 = sbr.rel (%p393) target = $region44
        $region43: #{tpu_custom_call.1} parent=11 // pred_region
          _
        $region44: #{tpu_custom_call.1} parent=11 // pred_fallthru
          _
      $region12: #{tpu_custom_call.1} parent=5 // pred_fallthru
        _
      %p396 = scmp.lt.s32.totalorder %s31, 2
      // Predicated region
      $region45: #{tpu_custom_call.1} parent=5 // pred_check
        %p397 = pneg %p396
      $region46: #{tpu_custom_call.1} parent=5 // pred_check_branch
        %399 = sbr.rel (%p397) target = $region48
      $region47: #{tpu_custom_call.1} parent=5 // pred_region
        // Predicated region
        $region49: #{tpu_custom_call.1} parent=47 // pred_check
          %p400 = pneg %p51
        $region50: #{tpu_custom_call.1} parent=47 // pred_check_branch
          %402 = sbr.rel (%p400) target = $region52
        $region51: #{tpu_custom_call.1} parent=47 // pred_region
          %s403 = sand.u32 %s41, 1
          %s404 = scalar_lea.sflag [#allocation3], %s403
          %s405 = sand.u32 %s41, 1
          %s406 = smul.addr %s405, 8
          %s407 = scalar_lea.vmem [#allocation2], %s406
          %s409 = ssub.s32 128, 128
          %410 = vsyncadd %s404, %s409
          %s411 = smul.addr %s31, 128
          %s412 = scalar_lea.hbm %s0, %s411
          %s414 = sshll.u32 %s407, 4
          %s415 = int_to_ptr.vmem [resolvable:$true] %s414
          %417 = dma.hbm_to_vmem [thread:$0]  %s412, 128, %s415, %s404
        $region52: #{tpu_custom_call.1} parent=47 // pred_fallthru
          _
        // Predicated region
        $region53: #{tpu_custom_call.1} parent=47 // pred_check
          %p418 = pneg %p77
        $region54: #{tpu_custom_call.1} parent=47 // pred_check_branch
          %420 = sbr.rel (%p418) target = $region56
        $region55: #{tpu_custom_call.1} parent=47 // pred_region
          %s421 = sand.u32 %s31, 1
          %s422 = scalar_lea.sflag [#allocation6], %s421
          %s423 = sand.u32 %s67, 1
          %s424 = smul.addr %s423, 8
          %s425 = scalar_lea.vmem [#allocation5], %s424
          %s427 = ssub.s32 128, 128
          %428 = vsyncadd %s422, %s427
          %s429 = smul.addr %s31, 128
          %s430 = scalar_lea.hbm %s1, %s429
          %s432 = sshll.u32 %s425, 4
          %s433 = int_to_ptr.vmem [resolvable:$true] %s432
          %435 = dma.hbm_to_vmem [thread:$0]  %s430, 128, %s433, %s422
        $region56: #{tpu_custom_call.1} parent=47 // pred_fallthru
          _
        // Predicated region
        $region57: #{tpu_custom_call.1} parent=47 // pred_check
          %p436 = pneg %p103
        $region58: #{tpu_custom_call.1} parent=47 // pred_check_branch
          %438 = sbr.rel (%p436) target = $region60
        $region59: #{tpu_custom_call.1} parent=47 // pred_region
          %s439 = sand.u32 %s31, 1
          %s440 = scalar_lea.sflag [#allocation6], %s439
          %s441 = sand.u32 %s93, 1
          %s442 = smul.addr %s441, 8
          %s443 = scalar_lea.vmem [#allocation7], %s442
          %s445 = ssub.s32 128, 128
          %446 = vsyncadd %s440, %s445
          %s447 = smul.addr %s31, 128
          %s448 = scalar_lea.hbm %s2, %s447
          %s450 = sshll.u32 %s443, 4
          %s451 = int_to_ptr.vmem [resolvable:$true] %s450
          %453 = dma.hbm_to_vmem [thread:$0]  %s448, 128, %s451, %s440
        $region60: #{tpu_custom_call.1} parent=47 // pred_fallthru
          _
        // Predicated region
        $region61: #{tpu_custom_call.1} parent=47 // pred_check
          %p454 = pneg %p129
        $region62: #{tpu_custom_call.1} parent=47 // pred_check_branch
          %456 = sbr.rel (%p454) target = $region64
        $region63: #{tpu_custom_call.1} parent=47 // pred_region
          %s457 = sand.u32 %s31, 1
          %s458 = scalar_lea.sflag [#allocation9], %s457
          %s459 = sand.u32 %s119, 1
          %s460 = smul.addr %s459, 2
          %s461 = scalar_lea.vmem [#allocation8], %s460
          %s463 = ssub.s32 32, 32
          %464 = vsyncadd %s458, %s463
          %s465 = smul.addr %s31, 32
          %s466 = scalar_lea.hbm %s3, %s465
          %s468 = sshll.u32 %s461, 4
          %s469 = int_to_ptr.vmem [resolvable:$true] %s468
          %471 = dma.hbm_to_vmem [thread:$0]  %s466, 32, %s469, %s458
        $region64: #{tpu_custom_call.1} parent=47 // pred_fallthru
          _
      $region48: #{tpu_custom_call.1} parent=5 // pred_fallthru
        _
      %p472 = scmp.le.s32.totalorder 1, %s31
      %p473 = scmp.lt.s32.totalorder %s31, 3
      %p474 = pnand %p472, %p473
      %p475 = pneg %p474
      // Predicated region
      $region65: #{tpu_custom_call.1} parent=5 // pred_check
        _
      $region66: #{tpu_custom_call.1} parent=5 // pred_check_branch
        %477 = sbr.rel (%p474) target = $region68
      $region67: #{tpu_custom_call.1} parent=5 // pred_region
        %s478 = ssub.s32 %s31, 1
        %s479 = sand.u32 %s44, 1
        %s480 = scalar_lea.sflag [#allocation3], %s479
        %s481 = sand.u32 %s44, 1
        %s482 = smul.addr %s481, 8
        %s483 = scalar_lea.vmem [#allocation2], %s482
        // Predicated region
        $region69: #{tpu_custom_call.1} parent=67 // pred_check
          %p484 = pneg %p57
        $region70: #{tpu_custom_call.1} parent=67 // pred_check_branch
          %486 = sbr.rel (%p484) target = $region72
        $region71: #{tpu_custom_call.1} parent=67 // pred_region
          %487 = dma.done %s480, 128
        $region72: #{tpu_custom_call.1} parent=67 // pred_fallthru
          _
        %s488 = sand.u32 %s36, 1
        %s489 = scalar_lea.sflag [#allocation6], %s488
        %s490 = sand.u32 %s70, 1
        %s491 = smul.addr %s490, 8
        %s492 = scalar_lea.vmem [#allocation5], %s491
        // Predicated region
        $region73: #{tpu_custom_call.1} parent=67 // pred_check
          %p493 = pneg %p83
        $region74: #{tpu_custom_call.1} parent=67 // pred_check_branch
          %495 = sbr.rel (%p493) target = $region76
        $region75: #{tpu_custom_call.1} parent=67 // pred_region
          %496 = dma.done %s489, 128
        $region76: #{tpu_custom_call.1} parent=67 // pred_fallthru
          _
        %s497 = sand.u32 %s36, 1
        %s498 = scalar_lea.sflag [#allocation6], %s497
        %s499 = sand.u32 %s96, 1
        %s500 = smul.addr %s499, 8
        %s501 = scalar_lea.vmem [#allocation7], %s500
        // Predicated region
        $region77: #{tpu_custom_call.1} parent=67 // pred_check
          %p502 = pneg %p109
        $region78: #{tpu_custom_call.1} parent=67 // pred_check_branch
          %504 = sbr.rel (%p502) target = $region80
        $region79: #{tpu_custom_call.1} parent=67 // pred_region
          %505 = dma.done %s498, 128
        $region80: #{tpu_custom_call.1} parent=67 // pred_fallthru
          _
        %s506 = sand.u32 %s36, 1
        %s507 = scalar_lea.sflag [#allocation9], %s506
        %s508 = sand.u32 %s122, 1
        %s509 = smul.addr %s508, 2
        %s510 = scalar_lea.vmem [#allocation8], %s509
        // Predicated region
        $region81: #{tpu_custom_call.1} parent=67 // pred_check
          %p511 = pneg %p135
        $region82: #{tpu_custom_call.1} parent=67 // pred_check_branch
          %513 = sbr.rel (%p511) target = $region84
        $region83: #{tpu_custom_call.1} parent=67 // pred_region
          %514 = dma.done %s507, 32
        $region84: #{tpu_custom_call.1} parent=67 // pred_fallthru
          _
        // Predicated region
        $region85: #{tpu_custom_call.1} parent=67 // pred_check
          %p515 = pneg %p156
        $region86: #{tpu_custom_call.1} parent=67 // pred_check_branch
          %517 = sbr.rel (%p515) target = $region88
        $region87: #{tpu_custom_call.1} parent=67 // pred_region
          %518 = dma.done [#allocation9], 256
        $region88: #{tpu_custom_call.1} parent=67 // pred_fallthru
          _
        // Predicated region
        $region89: #{tpu_custom_call.1} parent=67 // pred_check
          %p519 = pneg %p240
        $region90: #{tpu_custom_call.1} parent=67 // pred_check_branch
          %521 = sbr.rel (%p519) target = $region92
        $region91: #{tpu_custom_call.1} parent=67 // pred_region
          %522 = dma.done [#allocation12], 256
        $region92: #{tpu_custom_call.1} parent=67 // pred_fallthru
          _
        // Predicated region
        $region93: #{tpu_custom_call.1} parent=67 // pred_check
          %p523 = pneg %p261
        $region94: #{tpu_custom_call.1} parent=67 // pred_check_branch
          %525 = sbr.rel (%p523) target = $region96
        $region95: #{tpu_custom_call.1} parent=67 // pred_region
          %526 = dma.done [#allocation12], 16
        $region96: #{tpu_custom_call.1} parent=67 // pred_fallthru
          _
        %s527 = sand.u32 %s44, 1
        %s528 = scalar_lea.sflag [#allocation3], %s527
        %s529 = sand.u32 %s44, 1
        %s530 = smul.addr %s529, 8
        %s531 = scalar_lea.vmem [#allocation2], %s530
        %p532 = pneg %p57
        %p533 = pneg %p54
        %s534 = sand.u32 %s36, 1
        %s535 = scalar_lea.sflag [#allocation6], %s534
        %s536 = sand.u32 %s70, 1
        %s537 = smul.addr %s536, 8
        %s538 = scalar_lea.vmem [#allocation5], %s537
        %p539 = pneg %p83
        %p540 = pneg %p80
        %s541 = sand.u32 %s36, 1
        %s542 = scalar_lea.sflag [#allocation6], %s541
        %s543 = sand.u32 %s96, 1
        %s544 = smul.addr %s543, 8
        %s545 = scalar_lea.vmem [#allocation7], %s544
        %p546 = pneg %p109
        %p547 = pneg %p106
        %s548 = sand.u32 %s36, 1
        %s549 = scalar_lea.sflag [#allocation9], %s548
        %s550 = sand.u32 %s122, 1
        %s551 = smul.addr %s550, 2
        %s552 = scalar_lea.vmem [#allocation8], %s551
        %p553 = pneg %p135
        %p554 = pneg %p132
        %p555 = pneg %p156
        %p556 = pneg %p153
        %p557 = pneg %p177
        %p558 = pneg %p174
        %p559 = pneg %p198
        %p560 = pneg %p195
        %p561 = pneg %p219
        %p562 = pneg %p216
        %p563 = pneg %p240
        %p564 = pneg %p237
        %p565 = pneg %p261
        %p566 = pneg %p258
        %p567 = pneg %p282
        %p568 = pneg %p279
        %p569 = pneg %p303
        %p570 = pneg %p300
        %p571 = pneg %p329
        %p572 = pneg %p326
        %s573 = sand.u32 %s316, 1
        %s574 = scalar_lea.sflag [#allocation4], %s573
        %s575 = sand.u32 %s316, 1
        %s576 = smul.addr %s575, 8
        %s577 = scalar_lea.vmem [#allocation14], %s576
        %v579 = vld [vmem:[%s483] sm:$0xff]
        %v580 = vpack.c.bf16 %v579, %v579
        %v581 = vld [vmem:[%s492] sm:$0xff]
        %v582 = vpack.c.bf16 %v581, %v581
        %v583 = vld [vmem:[%s501] sm:$0xff]
        %v584 = vpack.c.bf16 %v583, %v583
        %v585 = vld [vmem:[#allocation10] sm:$0xf]
        %v586 = vld [vmem:[#allocation10 + $0x4] sm:$0xf]
        %v587 = vld [vmem:[#allocation10 + $0x8] sm:$0xf]
        %v588 = vld [vmem:[#allocation10 + $0xc] sm:$0xf]
        %v589 = vld [vmem:[%s5] sm:$0x1]
        %v591 = vlaneseq
        %v592 = vshrl.u32 %v591, 7
        %v593 = vsub.s32 0, %v592
        %v594 = vrot.slane %v589, %v593
        %v600 = vunpack.c.l.b16 %v585
        %v601 = vunpack.c.l.b16 %v586
        %v602 = vunpack.c.l.b16 %v587
        %v603 = vunpack.c.l.b16 %v588
        %v604 = vpack.c.b16 %v601, %v600
        %v605 = vpack.c.b16 %v603, %v602
        %vm608 = vcmask 261120
        %v610 = vsel %vm608, %v580, 0
        %612 = vmatprep.subr.bf16.mxu0 0
        %613 = vmatpush1.bf16.msra.mxu0 %v604
        %614 = vmatprep.subr.bf16.mxu0 0
        %615 = vmatpush1.bf16.msra.mxu0 %v605
        %616 = vmatprep.subr.bf16.mxu0 0
        %617 = vmatpush1.bf16.msra.mxu0 0
        %618 = vmatprep.subr.bf16.mxu0 0
        %619 = vmatpush1.bf16.msra.mxu0 0
        %620 = vmatprep.subr.bf16.mxu0 0
        %621 = vmatpush1.bf16.msra.mxu0 0
        %622 = vmatprep.subr.bf16.mxu0 0
        %623 = vmatpush1.bf16.msra.mxu0 0
        %624 = vmatprep.subr.bf16.mxu0 0
        %625 = vmatpush1.bf16.msra.mxu0 0
        %626 = vmatprep.subr.bf16.mxu0 0
        %627 = vmatpush1.bf16.msra.mxu0 0
        %628 = vmatprep.subr.bf16.mxu0 0
        %629 = vmatpush1.bf16.msra.mxu0 0
        %630 = vmatprep.subr.bf16.mxu0 0
        %631 = vmatpush1.bf16.msra.mxu0 0
        %632 = vmatprep.subr.bf16.mxu0 0
        %633 = vmatpush1.bf16.msra.mxu0 0
        %634 = vmatprep.subr.bf16.mxu0 0
        %635 = vmatpush1.bf16.msra.mxu0 0
        %636 = vmatprep.subr.bf16.mxu0 0
        %637 = vmatpush1.bf16.msra.mxu0 0
        %638 = vmatprep.subr.bf16.mxu0 0
        %639 = vmatpush1.bf16.msra.mxu0 0
        %640 = vmatprep.subr.bf16.mxu0 0
        %641 = vmatpush1.bf16.msra.mxu0 0
        %642 = vmatprep.subr.bf16.mxu0 0
        %643 = vmatpush1.bf16.msra.mxu0 0
        %644 = vmatprep.mubr.bf16.mxu0 0
        %645 = vmatmul.mubr.bf16.gmra.mrb[0].mxu0 %v610
        %v646 = vpop.f32.mrb[0].mxu0
        %v647 = vadd.f32 %v594, %v646
        %v648 = vpop.f32.mrb[0].mxu0
        %v649 = vpop.f32.mrb[0].mxu0
        %v650 = vpop.f32.mrb[0].mxu0
        %651 = vdwg.mxu0
        %v652 = vld [vmem:[%s6] sm:$0xf]
        %v653 = vld [vmem:[%s6 + $0x4] sm:$0xf]
        %v654 = vld [vmem:[%s6 + $0x8] sm:$0xf]
        %v655 = vld [vmem:[%s6 + $0xc] sm:$0xf]
        %v656 = vld [vmem:[%s7] sm:$0x1]
        %v658 = vlaneseq
        %v659 = vshrl.u32 %v658, 7
        %v660 = vsub.s32 0, %v659
        %v661 = vrot.slane %v656, %v660
        %v667 = vunpack.c.l.b16 %v652
        %v668 = vunpack.c.l.b16 %v653
        %v669 = vunpack.c.l.b16 %v654
        %v670 = vunpack.c.l.b16 %v655
        %v671 = vpack.c.b16 %v668, %v667
        %v672 = vpack.c.b16 %v670, %v669
        %v676 = vsel %vm608, %v582, 0
        %678 = vmatprep.subr.bf16.mxu0 0
        %679 = vmatpush1.bf16.msra.mxu0 %v671
        %680 = vmatprep.subr.bf16.mxu0 0
        %681 = vmatpush1.bf16.msra.mxu0 %v672
        %682 = vmatprep.subr.bf16.mxu0 0
        %683 = vmatpush1.bf16.msra.mxu0 0
        %684 = vmatprep.subr.bf16.mxu0 0
        %685 = vmatpush1.bf16.msra.mxu0 0
        %686 = vmatprep.subr.bf16.mxu0 0
        %687 = vmatpush1.bf16.msra.mxu0 0
        %688 = vmatprep.subr.bf16.mxu0 0
        %689 = vmatpush1.bf16.msra.mxu0 0
        %690 = vmatprep.subr.bf16.mxu0 0
        %691 = vmatpush1.bf16.msra.mxu0 0
        %692 = vmatprep.subr.bf16.mxu0 0
        %693 = vmatpush1.bf16.msra.mxu0 0
        %694 = vmatprep.subr.bf16.mxu0 0
        %695 = vmatpush1.bf16.msra.mxu0 0
        %696 = vmatprep.subr.bf16.mxu0 0
        %697 = vmatpush1.bf16.msra.mxu0 0
        %698 = vmatprep.subr.bf16.mxu0 0
        %699 = vmatpush1.bf16.msra.mxu0 0
        %700 = vmatprep.subr.bf16.mxu0 0
        %701 = vmatpush1.bf16.msra.mxu0 0
        %702 = vmatprep.subr.bf16.mxu0 0
        %703 = vmatpush1.bf16.msra.mxu0 0
        %704 = vmatprep.subr.bf16.mxu0 0
        %705 = vmatpush1.bf16.msra.mxu0 0
        %706 = vmatprep.subr.bf16.mxu0 0
        %707 = vmatpush1.bf16.msra.mxu0 0
        %708 = vmatprep.subr.bf16.mxu0 0
        %709 = vmatpush1.bf16.msra.mxu0 0
        %710 = vmatprep.mubr.bf16.mxu0 0
        %711 = vmatmul.mubr.bf16.gmra.mrb[0].mxu0 %v676
        %v712 = vpop.f32.mrb[0].mxu0
        %v713 = vadd.f32 %v661, %v712
        %v714 = vpop.f32.mrb[0].mxu0
        %v715 = vpop.f32.mrb[0].mxu0
        %v716 = vpop.f32.mrb[0].mxu0
        %717 = vdwg.mxu0
        %v718 = vld [vmem:[#allocation11] sm:$0xf]
        %v719 = vld [vmem:[#allocation11 + $0x4] sm:$0xf]
        %v720 = vld [vmem:[#allocation11 + $0x8] sm:$0xf]
        %v721 = vld [vmem:[#allocation11 + $0xc] sm:$0xf]
        %v722 = vld [vmem:[#allocation13] sm:$0x1]
        %v724 = vlaneseq
        %v725 = vshrl.u32 %v724, 7
        %v726 = vsub.s32 0, %v725
        %v727 = vrot.slane %v722, %v726
        %v733 = vunpack.c.l.b16 %v718
        %v734 = vunpack.c.l.b16 %v719
        %v735 = vunpack.c.l.b16 %v720
        %v736 = vunpack.c.l.b16 %v721
        %v737 = vpack.c.b16 %v734, %v733
        %v738 = vpack.c.b16 %v736, %v735
        %v742 = vsel %vm608, %v584, 0
        %744 = vmatprep.subr.bf16.mxu0 0
        %745 = vmatpush1.bf16.msra.mxu0 %v737
        %746 = vmatprep.subr.bf16.mxu0 0
        %747 = vmatpush1.bf16.msra.mxu0 %v738
        %748 = vmatprep.subr.bf16.mxu0 0
        %749 = vmatpush1.bf16.msra.mxu0 0
        %750 = vmatprep.subr.bf16.mxu0 0
        %751 = vmatpush1.bf16.msra.mxu0 0
        %752 = vmatprep.subr.bf16.mxu0 0
        %753 = vmatpush1.bf16.msra.mxu0 0
        %754 = vmatprep.subr.bf16.mxu0 0
        %755 = vmatpush1.bf16.msra.mxu0 0
        %756 = vmatprep.subr.bf16.mxu0 0
        %757 = vmatpush1.bf16.msra.mxu0 0
        %758 = vmatprep.subr.bf16.mxu0 0
        %759 = vmatpush1.bf16.msra.mxu0 0
        %760 = vmatprep.subr.bf16.mxu0 0
        %761 = vmatpush1.bf16.msra.mxu0 0
        %762 = vmatprep.subr.bf16.mxu0 0
        %763 = vmatpush1.bf16.msra.mxu0 0
        %764 = vmatprep.subr.bf16.mxu0 0
        %765 = vmatpush1.bf16.msra.mxu0 0
        %766 = vmatprep.subr.bf16.mxu0 0
        %767 = vmatpush1.bf16.msra.mxu0 0
        %768 = vmatprep.subr.bf16.mxu0 0
        %769 = vmatpush1.bf16.msra.mxu0 0
        %770 = vmatprep.subr.bf16.mxu0 0
        %771 = vmatpush1.bf16.msra.mxu0 0
        %772 = vmatprep.subr.bf16.mxu0 0
        %773 = vmatpush1.bf16.msra.mxu0 0
        %774 = vmatprep.subr.bf16.mxu0 0
        %775 = vmatpush1.bf16.msra.mxu0 0
        %776 = vmatprep.mubr.bf16.mxu0 0
        %777 = vmatmul.mubr.bf16.gmra.mrb[0].mxu0 %v742
        %v778 = vpop.f32.mrb[0].mxu0
        %v779 = vadd.f32 %v727, %v778
        %v780 = vpop.f32.mrb[0].mxu0
        %v781 = vpop.f32.mrb[0].mxu0
        %v782 = vpop.f32.mrb[0].mxu0
        %783 = vdwg.mxu0
        %v784 = vld [vmem:[%s510] sm:$0x3]
        %v785 = vunpack.c.0.s8 %v784
        %v786 = vcvt.s32.f32 %v785
        %vm787 = vcmp.eq.f32.partialorder %v786, 0.0
        %v788 = vpack.c.bf16 %v647, %v647
        %v789 = vpack.c.bf16 %v713, %v713
        %v790 = vpack.c.bf16 %v779, %v779
        %vm791 = vcmask 31744
        %v793 = vsel %vm791, %v788, 0
        %v796 = vsel %vm791, %v789, 0
        %798 = vmatprep.subr.bf16.mxu0 0
        %799 = vmatpush1.bf16.xpose.msra.mxu0 %v796
        %800 = vmatprep.subr.bf16.mxu0 0
        %801 = vmatpush1.bf16.xpose.msra.mxu0 0
        %802 = vmatprep.subr.bf16.mxu0 0
        %803 = vmatpush1.bf16.xpose.msra.mxu0 0
        %804 = vmatprep.subr.bf16.mxu0 0
        %805 = vmatpush1.bf16.xpose.msra.mxu0 0
        %806 = vmatprep.subr.bf16.mxu0 0
        %807 = vmatpush1.bf16.xpose.msra.mxu0 0
        %808 = vmatprep.subr.bf16.mxu0 0
        %809 = vmatpush1.bf16.xpose.msra.mxu0 0
        %810 = vmatprep.subr.bf16.mxu0 0
        %811 = vmatpush1.bf16.xpose.msra.mxu0 0
        %812 = vmatprep.subr.bf16.mxu0 0
        %813 = vmatpush1.bf16.xpose.msra.mxu0 0
        %814 = vmatprep.subr.bf16.mxu0 0
        %815 = vmatpush1.bf16.xpose.msra.mxu0 0
        %816 = vmatprep.subr.bf16.mxu0 0
        %817 = vmatpush1.bf16.xpose.msra.mxu0 0
        %818 = vmatprep.subr.bf16.mxu0 0
        %819 = vmatpush1.bf16.xpose.msra.mxu0 0
        %820 = vmatprep.subr.bf16.mxu0 0
        %821 = vmatpush1.bf16.xpose.msra.mxu0 0
        %822 = vmatprep.subr.bf16.mxu0 0
        %823 = vmatpush1.bf16.xpose.msra.mxu0 0
        %824 = vmatprep.subr.bf16.mxu0 0
        %825 = vmatpush1.bf16.xpose.msra.mxu0 0
        %826 = vmatprep.subr.bf16.mxu0 0
        %827 = vmatpush1.bf16.xpose.msra.mxu0 0
        %828 = vmatprep.subr.bf16.mxu0 0
        %829 = vmatpush1.bf16.xpose.msra.mxu0 0
        %830 = vmatprep.mubr.bf16.mxu0 0
        %831 = vmatmul.mubr.bf16.gmra.mrb[0].mxu0 %v793
        %v832 = vpop.f32.mrb[0].mxu0
        %v833 = vadd.f32 0.0, %v832
        %v834 = vpop.f32.mrb[0].mxu0
        %v835 = vpop.f32.mrb[0].mxu0
        %v836 = vpop.f32.mrb[0].mxu0
        %837 = vdwg.mxu0
        %v838 = vsel %vm787, -1e+09, %v833
        %vm839 = vcmask 64512
        %v840 = vsel %vm839, %v838, -inf
        %841 = vmax.xlane.f32.xlu0 %v840
        %v842 = vpop.xlane.xlu0 %841
        %v843 = vsub.f32 %v838, %v842
        %v844 = vmul.f32 %v843, 1.442695
        %v845 = vpow.pop %v844
        %v846 = vsel %vm839, %v845, 0.0
        %847 = vadd.xlane.f32.xlu0 %v846
        %v848 = vpop.xlane.xlu0 %847
        %v849 = vrcp.pop %v848
        %v850 = vmul.f32 %v845, %v849
        %v851 = vpack.c.bf16 %v850, %v850
        %v853 = vsel %vm839, %v851, 0
        %vm855 = vcmask 1043456
        %v857 = vsel %vm855, %v790, 0
        %859 = vmatprep.subr.bf16.mxu0 0
        %860 = vmatpush1.bf16.msra.mxu0 %v857
        %861 = vmatprep.subr.bf16.mxu0 0
        %862 = vmatpush1.bf16.msra.mxu0 0
        %863 = vmatprep.subr.bf16.mxu0 0
        %864 = vmatpush1.bf16.msra.mxu0 0
        %865 = vmatprep.subr.bf16.mxu0 0
        %866 = vmatpush1.bf16.msra.mxu0 0
        %867 = vmatprep.subr.bf16.mxu0 0
        %868 = vmatpush1.bf16.msra.mxu0 0
        %869 = vmatprep.subr.bf16.mxu0 0
        %870 = vmatpush1.bf16.msra.mxu0 0
        %871 = vmatprep.subr.bf16.mxu0 0
        %872 = vmatpush1.bf16.msra.mxu0 0
        %873 = vmatprep.subr.bf16.mxu0 0
        %874 = vmatpush1.bf16.msra.mxu0 0
        %875 = vmatprep.subr.bf16.mxu0 0
        %876 = vmatpush1.bf16.msra.mxu0 0
        %877 = vmatprep.subr.bf16.mxu0 0
        %878 = vmatpush1.bf16.msra.mxu0 0
        %879 = vmatprep.subr.bf16.mxu0 0
        %880 = vmatpush1.bf16.msra.mxu0 0
        %881 = vmatprep.subr.bf16.mxu0 0
        %882 = vmatpush1.bf16.msra.mxu0 0
        %883 = vmatprep.subr.bf16.mxu0 0
        %884 = vmatpush1.bf16.msra.mxu0 0
        %885 = vmatprep.subr.bf16.mxu0 0
        %886 = vmatpush1.bf16.msra.mxu0 0
        %887 = vmatprep.subr.bf16.mxu0 0
        %888 = vmatpush1.bf16.msra.mxu0 0
        %889 = vmatprep.subr.bf16.mxu0 0
        %890 = vmatpush1.bf16.msra.mxu0 0
        %891 = vmatprep.mubr.bf16.mxu0 0
        %892 = vmatmul.mubr.bf16.gmra.mrb[0].mxu0 %v853
        %v893 = vpop.f32.mrb[0].mxu0
        %v894 = vadd.f32 0.0, %v893
        %v895 = vpop.f32.mrb[0].mxu0
        %v896 = vpop.f32.mrb[0].mxu0
        %v897 = vpop.f32.mrb[0].mxu0
        %898 = vdwg.mxu0
        %900 = vrot.lane.b32.xlu0 %v788, 124
        %v901 = vpop.permute.xlu0 %900
        %903 = vrot.lane.b32.xlu0 %v789, 124
        %v904 = vpop.permute.xlu0 %903
        %v906 = vsel %vm791, %v901, 0
        %v909 = vsel %vm791, %v904, 0
        %911 = vmatprep.subr.bf16.mxu0 0
        %912 = vmatpush1.bf16.xpose.msra.mxu0 %v909
        %913 = vmatprep.subr.bf16.mxu0 0
        %914 = vmatpush1.bf16.xpose.msra.mxu0 0
        %915 = vmatprep.subr.bf16.mxu0 0
        %916 = vmatpush1.bf16.xpose.msra.mxu0 0
        %917 = vmatprep.subr.bf16.mxu0 0
        %918 = vmatpush1.bf16.xpose.msra.mxu0 0
        %919 = vmatprep.subr.bf16.mxu0 0
        %920 = vmatpush1.bf16.xpose.msra.mxu0 0
        %921 = vmatprep.subr.bf16.mxu0 0
        %922 = vmatpush1.bf16.xpose.msra.mxu0 0
        %923 = vmatprep.subr.bf16.mxu0 0
        %924 = vmatpush1.bf16.xpose.msra.mxu0 0
        %925 = vmatprep.subr.bf16.mxu0 0
        %926 = vmatpush1.bf16.xpose.msra.mxu0 0
        %927 = vmatprep.subr.bf16.mxu0 0
        %928 = vmatpush1.bf16.xpose.msra.mxu0 0
        %929 = vmatprep.subr.bf16.mxu0 0
        %930 = vmatpush1.bf16.xpose.msra.mxu0 0
        %931 = vmatprep.subr.bf16.mxu0 0
        %932 = vmatpush1.bf16.xpose.msra.mxu0 0
        %933 = vmatprep.subr.bf16.mxu0 0
        %934 = vmatpush1.bf16.xpose.msra.mxu0 0
        %935 = vmatprep.subr.bf16.mxu0 0
        %936 = vmatpush1.bf16.xpose.msra.mxu0 0
        %937 = vmatprep.subr.bf16.mxu0 0
        %938 = vmatpush1.bf16.xpose.msra.mxu0 0
        %939 = vmatprep.subr.bf16.mxu0 0
        %940 = vmatpush1.bf16.xpose.msra.mxu0 0
        %941 = vmatprep.subr.bf16.mxu0 0
        %942 = vmatpush1.bf16.xpose.msra.mxu0 0
        %943 = vmatprep.mubr.bf16.mxu0 0
        %944 = vmatmul.mubr.bf16.gmra.mrb[0].mxu0 %v906
        %v945 = vpop.f32.mrb[0].mxu0
        %v946 = vadd.f32 0.0, %v945
        %v947 = vpop.f32.mrb[0].mxu0
        %v948 = vpop.f32.mrb[0].mxu0
        %v949 = vpop.f32.mrb[0].mxu0
        %950 = vdwg.mxu0
        %v951 = vsel %vm787, -1e+09, %v946
        %v952 = vsel %vm839, %v951, -inf
        %953 = vmax.xlane.f32.xlu0 %v952
        %v954 = vpop.xlane.xlu0 %953
        %v955 = vsub.f32 %v951, %v954
        %v956 = vmul.f32 %v955, 1.442695
        %v957 = vpow.pop %v956
        %v958 = vsel %vm839, %v957, 0.0
        %959 = vadd.xlane.f32.xlu0 %v958
        %v960 = vpop.xlane.xlu0 %959
        %v961 = vrcp.pop %v960
        %v962 = vmul.f32 %v957, %v961
        %v963 = vpack.c.bf16 %v962, %v962
        %965 = vrot.lane.b32.xlu0 %v790, 124
        %v966 = vpop.permute.xlu0 %965
        %v968 = vsel %vm839, %v963, 0
        %v971 = vsel %vm855, %v966, 0
        %973 = vmatprep.subr.bf16.mxu0 0
        %974 = vmatpush1.bf16.msra.mxu0 %v971
        %975 = vmatprep.subr.bf16.mxu0 0
        %976 = vmatpush1.bf16.msra.mxu0 0
        %977 = vmatprep.subr.bf16.mxu0 0
        %978 = vmatpush1.bf16.msra.mxu0 0
        %979 = vmatprep.subr.bf16.mxu0 0
        %980 = vmatpush1.bf16.msra.mxu0 0
        %981 = vmatprep.subr.bf16.mxu0 0
        %982 = vmatpush1.bf16.msra.mxu0 0
        %983 = vmatprep.subr.bf16.mxu0 0
        %984 = vmatpush1.bf16.msra.mxu0 0
        %985 = vmatprep.subr.bf16.mxu0 0
        %986 = vmatpush1.bf16.msra.mxu0 0
        %987 = vmatprep.subr.bf16.mxu0 0
        %988 = vmatpush1.bf16.msra.mxu0 0
        %989 = vmatprep.subr.bf16.mxu0 0
        %990 = vmatpush1.bf16.msra.mxu0 0
        %991 = vmatprep.subr.bf16.mxu0 0
        %992 = vmatpush1.bf16.msra.mxu0 0
        %993 = vmatprep.subr.bf16.mxu0 0
        %994 = vmatpush1.bf16.msra.mxu0 0
        %995 = vmatprep.subr.bf16.mxu0 0
        %996 = vmatpush1.bf16.msra.mxu0 0
        %997 = vmatprep.subr.bf16.mxu0 0
        %998 = vmatpush1.bf16.msra.mxu0 0
        %999 = vmatprep.subr.bf16.mxu0 0
        %1000 = vmatpush1.bf16.msra.mxu0 0
        %1001 = vmatprep.subr.bf16.mxu0 0
        %1002 = vmatpush1.bf16.msra.mxu0 0
        %1003 = vmatprep.subr.bf16.mxu0 0
        %1004 = vmatpush1.bf16.msra.mxu0 0
        %1005 = vmatprep.mubr.bf16.mxu0 0
        %1006 = vmatmul.mubr.bf16.gmra.mrb[0].mxu0 %v968
        %v1007 = vpop.f32.mrb[0].mxu0
        %v1008 = vadd.f32 0.0, %v1007
        %v1009 = vpop.f32.mrb[0].mxu0
        %v1010 = vpop.f32.mrb[0].mxu0
        %v1011 = vpop.f32.mrb[0].mxu0
        %1012 = vdwg.mxu0
        %1013 = vrot.lane.b32.xlu0 %v788, 120
        %v1014 = vpop.permute.xlu0 %1013
        %1015 = vrot.lane.b32.xlu0 %v789, 120
        %v1016 = vpop.permute.xlu0 %1015
        %v1018 = vsel %vm791, %v1014, 0
        %v1021 = vsel %vm791, %v1016, 0
        %1023 = vmatprep.subr.bf16.mxu0 0
        %1024 = vmatpush1.bf16.xpose.msra.mxu0 %v1021
        %1025 = vmatprep.subr.bf16.mxu0 0
        %1026 = vmatpush1.bf16.xpose.msra.mxu0 0
        %1027 = vmatprep.subr.bf16.mxu0 0
        %1028 = vmatpush1.bf16.xpose.msra.mxu0 0
        %1029 = vmatprep.subr.bf16.mxu0 0
        %1030 = vmatpush1.bf16.xpose.msra.mxu0 0
        %1031 = vmatprep.subr.bf16.mxu0 0
        %1032 = vmatpush1.bf16.xpose.msra.mxu0 0
        %1033 = vmatprep.subr.bf16.mxu0 0
        %1034 = vmatpush1.bf16.xpose.msra.mxu0 0
        %1035 = vmatprep.subr.bf16.mxu0 0
        %1036 = vmatpush1.bf16.xpose.msra.mxu0 0
        %1037 = vmatprep.subr.bf16.mxu0 0
        %1038 = vmatpush1.bf16.xpose.msra.mxu0 0
        %1039 = vmatprep.subr.bf16.mxu0 0
        %1040 = vmatpush1.bf16.xpose.msra.mxu0 0
        %1041 = vmatprep.subr.bf16.mxu0 0
        %1042 = vmatpush1.bf16.xpose.msra.mxu0 0
        %1043 = vmatprep.subr.bf16.mxu0 0
        %1044 = vmatpush1.bf16.xpose.msra.mxu0 0
        %1045 = vmatprep.subr.bf16.mxu0 0
        %1046 = vmatpush1.bf16.xpose.msra.mxu0 0
        %1047 = vmatprep.subr.bf16.mxu0 0
        %1048 = vmatpush1.bf16.xpose.msra.mxu0 0
        %1049 = vmatprep.subr.bf16.mxu0 0
        %1050 = vmatpush1.bf16.xpose.msra.mxu0 0
        %1051 = vmatprep.subr.bf16.mxu0 0
        %1052 = vmatpush1.bf16.xpose.msra.mxu0 0
        %1053 = vmatprep.subr.bf16.mxu0 0
        %1054 = vmatpush1.bf16.xpose.msra.mxu0 0
        %1055 = vmatprep.mubr.bf16.mxu0 0
        %1056 = vmatmul.mubr.bf16.gmra.mrb[0].mxu0 %v1018
        %v1057 = vpop.f32.mrb[0].mxu0
        %v1058 = vadd.f32 0.0, %v1057
        %v1059 = vpop.f32.mrb[0].mxu0
        %v1060 = vpop.f32.mrb[0].mxu0
        %v1061 = vpop.f32.mrb[0].mxu0
        %1062 = vdwg.mxu0
        %v1063 = vsel %vm787, -1e+09, %v1058
        %v1064 = vsel %vm839, %v1063, -inf
        %1065 = vmax.xlane.f32.xlu0 %v1064
        %v1066 = vpop.xlane.xlu0 %1065
        %v1067 = vsub.f32 %v1063, %v1066
        %v1068 = vmul.f32 %v1067, 1.442695
        %v1069 = vpow.pop %v1068
        %v1070 = vsel %vm839, %v1069, 0.0
        %1071 = vadd.xlane.f32.xlu0 %v1070
        %v1072 = vpop.xlane.xlu0 %1071
        %v1073 = vrcp.pop %v1072
        %v1074 = vmul.f32 %v1069, %v1073
        %v1075 = vpack.c.bf16 %v1074, %v1074
        %1076 = vrot.lane.b32.xlu0 %v790, 120
        %v1077 = vpop.permute.xlu0 %1076
        %v1079 = vsel %vm839, %v1075, 0
        %v1082 = vsel %vm855, %v1077, 0
        %1084 = vmatprep.subr.bf16.mxu0 0
        %1085 = vmatpush1.bf16.msra.mxu0 %v1082
        %1086 = vmatprep.subr.bf16.mxu0 0
        %1087 = vmatpush1.bf16.msra.mxu0 0
        %1088 = vmatprep.subr.bf16.mxu0 0
        %1089 = vmatpush1.bf16.msra.mxu0 0
        %1090 = vmatprep.subr.bf16.mxu0 0
        %1091 = vmatpush1.bf16.msra.mxu0 0
        %1092 = vmatprep.subr.bf16.mxu0 0
        %1093 = vmatpush1.bf16.msra.mxu0 0
        %1094 = vmatprep.subr.bf16.mxu0 0
        %1095 = vmatpush1.bf16.msra.mxu0 0
        %1096 = vmatprep.subr.bf16.mxu0 0
        %1097 = vmatpush1.bf16.msra.mxu0 0
        %1098 = vmatprep.subr.bf16.mxu0 0
        %1099 = vmatpush1.bf16.msra.mxu0 0
        %1100 = vmatprep.subr.bf16.mxu0 0
        %1101 = vmatpush1.bf16.msra.mxu0 0
        %1102 = vmatprep.subr.bf16.mxu0 0
        %1103 = vmatpush1.bf16.msra.mxu0 0
        %1104 = vmatprep.subr.bf16.mxu0 0
        %1105 = vmatpush1.bf16.msra.mxu0 0
        %1106 = vmatprep.subr.bf16.mxu0 0
        %1107 = vmatpush1.bf16.msra.mxu0 0
        %1108 = vmatprep.subr.bf16.mxu0 0
        %1109 = vmatpush1.bf16.msra.mxu0 0
        %1110 = vmatprep.subr.bf16.mxu0 0
        %1111 = vmatpush1.bf16.msra.mxu0 0
        %1112 = vmatprep.subr.bf16.mxu0 0
        %1113 = vmatpush1.bf16.msra.mxu0 0
        %1114 = vmatprep.subr.bf16.mxu0 0
        %1115 = vmatpush1.bf16.msra.mxu0 0
        %1116 = vmatprep.mubr.bf16.mxu0 0
        %1117 = vmatmul.mubr.bf16.gmra.mrb[0].mxu0 %v1079
        %v1118 = vpop.f32.mrb[0].mxu0
        %v1119 = vadd.f32 0.0, %v1118
        %v1120 = vpop.f32.mrb[0].mxu0
        %v1121 = vpop.f32.mrb[0].mxu0
        %v1122 = vpop.f32.mrb[0].mxu0
        %1123 = vdwg.mxu0
        %1124 = vrot.lane.b32.xlu0 %v788, 116
        %v1125 = vpop.permute.xlu0 %1124
        %1126 = vrot.lane.b32.xlu0 %v789, 116
        %v1127 = vpop.permute.xlu0 %1126
        %v1129 = vsel %vm791, %v1125, 0
        %v1132 = vsel %vm791, %v1127, 0
        %1134 = vmatprep.subr.bf16.mxu0 0
        %1135 = vmatpush1.bf16.xpose.msra.mxu0 %v1132
        %1136 = vmatprep.subr.bf16.mxu0 0
        %1137 = vmatpush1.bf16.xpose.msra.mxu0 0
        %1138 = vmatprep.subr.bf16.mxu0 0
        %1139 = vmatpush1.bf16.xpose.msra.mxu0 0
        %1140 = vmatprep.subr.bf16.mxu0 0
        %1141 = vmatpush1.bf16.xpose.msra.mxu0 0
        %1142 = vmatprep.subr.bf16.mxu0 0
        %1143 = vmatpush1.bf16.xpose.msra.mxu0 0
        %1144 = vmatprep.subr.bf16.mxu0 0
        %1145 = vmatpush1.bf16.xpose.msra.mxu0 0
        %1146 = vmatprep.subr.bf16.mxu0 0
        %1147 = vmatpush1.bf16.xpose.msra.mxu0 0
        %1148 = vmatprep.subr.bf16.mxu0 0
        %1149 = vmatpush1.bf16.xpose.msra.mxu0 0
        %1150 = vmatprep.subr.bf16.mxu0 0
        %1151 = vmatpush1.bf16.xpose.msra.mxu0 0
        %1152 = vmatprep.subr.bf16.mxu0 0
        %1153 = vmatpush1.bf16.xpose.msra.mxu0 0
        %1154 = vmatprep.subr.bf16.mxu0 0
        %1155 = vmatpush1.bf16.xpose.msra.mxu0 0
        %1156 = vmatprep.subr.bf16.mxu0 0
        %1157 = vmatpush1.bf16.xpose.msra.mxu0 0
        %1158 = vmatprep.subr.bf16.mxu0 0
        %1159 = vmatpush1.bf16.xpose.msra.mxu0 0
        %1160 = vmatprep.subr.bf16.mxu0 0
        %1161 = vmatpush1.bf16.xpose.msra.mxu0 0
        %1162 = vmatprep.subr.bf16.mxu0 0
        %1163 = vmatpush1.bf16.xpose.msra.mxu0 0
        %1164 = vmatprep.subr.bf16.mxu0 0
        %1165 = vmatpush1.bf16.xpose.msra.mxu0 0
        %1166 = vmatprep.mubr.bf16.mxu0 0
        %1167 = vmatmul.mubr.bf16.gmra.mrb[0].mxu0 %v1129
        %v1168 = vpop.f32.mrb[0].mxu0
        %v1169 = vadd.f32 0.0, %v1168
        %v1170 = vpop.f32.mrb[0].mxu0
        %v1171 = vpop.f32.mrb[0].mxu0
        %v1172 = vpop.f32.mrb[0].mxu0
        %1173 = vdwg.mxu0
        %v1174 = vsel %vm787, -1e+09, %v1169
        %v1175 = vsel %vm839, %v1174, -inf
        %1176 = vmax.xlane.f32.xlu0 %v1175
        %v1177 = vpop.xlane.xlu0 %1176
        %v1178 = vsub.f32 %v1174, %v1177
        %v1179 = vmul.f32 %v1178, 1.442695
        %v1180 = vpow.pop %v1179
        %v1181 = vsel %vm839, %v1180, 0.0
        %1182 = vadd.xlane.f32.xlu0 %v1181
        %v1183 = vpop.xlane.xlu0 %1182
        %v1184 = vrcp.pop %v1183
        %v1185 = vmul.f32 %v1180, %v1184
        %v1186 = vpack.c.bf16 %v1185, %v1185
        %1187 = vrot.lane.b32.xlu0 %v790, 116
        %v1188 = vpop.permute.xlu0 %1187
        %v1190 = vsel %vm839, %v1186, 0
        %v1193 = vsel %vm855, %v1188, 0
        %1195 = vmatprep.subr.bf16.mxu0 0
        %1196 = vmatpush1.bf16.msra.mxu0 %v1193
        %1197 = vmatprep.subr.bf16.mxu0 0
        %1198 = vmatpush1.bf16.msra.mxu0 0
        %1199 = vmatprep.subr.bf16.mxu0 0
        %1200 = vmatpush1.bf16.msra.mxu0 0
        %1201 = vmatprep.subr.bf16.mxu0 0
        %1202 = vmatpush1.bf16.msra.mxu0 0
        %1203 = vmatprep.subr.bf16.mxu0 0
        %1204 = vmatpush1.bf16.msra.mxu0 0
        %1205 = vmatprep.subr.bf16.mxu0 0
        %1206 = vmatpush1.bf16.msra.mxu0 0
        %1207 = vmatprep.subr.bf16.mxu0 0
        %1208 = vmatpush1.bf16.msra.mxu0 0
        %1209 = vmatprep.subr.bf16.mxu0 0
        %1210 = vmatpush1.bf16.msra.mxu0 0
        %1211 = vmatprep.subr.bf16.mxu0 0
        %1212 = vmatpush1.bf16.msra.mxu0 0
        %1213 = vmatprep.subr.bf16.mxu0 0
        %1214 = vmatpush1.bf16.msra.mxu0 0
        %1215 = vmatprep.subr.bf16.mxu0 0
        %1216 = vmatpush1.bf16.msra.mxu0 0
        %1217 = vmatprep.subr.bf16.mxu0 0
        %1218 = vmatpush1.bf16.msra.mxu0 0
        %1219 = vmatprep.subr.bf16.mxu0 0
        %1220 = vmatpush1.bf16.msra.mxu0 0
        %1221 = vmatprep.subr.bf16.mxu0 0
        %1222 = vmatpush1.bf16.msra.mxu0 0
        %1223 = vmatprep.subr.bf16.mxu0 0
        %1224 = vmatpush1.bf16.msra.mxu0 0
        %1225 = vmatprep.subr.bf16.mxu0 0
        %1226 = vmatpush1.bf16.msra.mxu0 0
        %1227 = vmatprep.mubr.bf16.mxu0 0
        %1228 = vmatmul.mubr.bf16.gmra.mrb[0].mxu0 %v1190
        %v1229 = vpop.f32.mrb[0].mxu0
        %v1230 = vadd.f32 0.0, %v1229
        %v1231 = vpop.f32.mrb[0].mxu0
        %v1232 = vpop.f32.mrb[0].mxu0
        %v1233 = vpop.f32.mrb[0].mxu0
        %1234 = vdwg.mxu0
        %1235 = vrot.lane.b32.xlu0 %v788, 112
        %v1236 = vpop.permute.xlu0 %1235
        %1237 = vrot.lane.b32.xlu0 %v789, 112
        %v1238 = vpop.permute.xlu0 %1237
        %v1240 = vsel %vm791, %v1236, 0
        %v1243 = vsel %vm791, %v1238, 0
        %1245 = vmatprep.subr.bf16.mxu0 0
        %1246 = vmatpush1.bf16.xpose.msra.mxu0 %v1243
        %1247 = vmatprep.subr.bf16.mxu0 0
        %1248 = vmatpush1.bf16.xpose.msra.mxu0 0
        %1249 = vmatprep.subr.bf16.mxu0 0
        %1250 = vmatpush1.bf16.xpose.msra.mxu0 0
        %1251 = vmatprep.subr.bf16.mxu0 0
        %1252 = vmatpush1.bf16.xpose.msra.mxu0 0
        %1253 = vmatprep.subr.bf16.mxu0 0
        %1254 = vmatpush1.bf16.xpose.msra.mxu0 0
        %1255 = vmatprep.subr.bf16.mxu0 0
        %1256 = vmatpush1.bf16.xpose.msra.mxu0 0
        %1257 = vmatprep.subr.bf16.mxu0 0
        %1258 = vmatpush1.bf16.xpose.msra.mxu0 0
        %1259 = vmatprep.subr.bf16.mxu0 0
        %1260 = vmatpush1.bf16.xpose.msra.mxu0 0
        %1261 = vmatprep.subr.bf16.mxu0 0
        %1262 = vmatpush1.bf16.xpose.msra.mxu0 0
        %1263 = vmatprep.subr.bf16.mxu0 0
        %1264 = vmatpush1.bf16.xpose.msra.mxu0 0
        %1265 = vmatprep.subr.bf16.mxu0 0
        %1266 = vmatpush1.bf16.xpose.msra.mxu0 0
        %1267 = vmatprep.subr.bf16.mxu0 0
        %1268 = vmatpush1.bf16.xpose.msra.mxu0 0
        %1269 = vmatprep.subr.bf16.mxu0 0
        %1270 = vmatpush1.bf16.xpose.msra.mxu0 0
        %1271 = vmatprep.subr.bf16.mxu0 0
        %1272 = vmatpush1.bf16.xpose.msra.mxu0 0
        %1273 = vmatprep.subr.bf16.mxu0 0
        %1274 = vmatpush1.bf16.xpose.msra.mxu0 0
        %1275 = vmatprep.subr.bf16.mxu0 0
        %1276 = vmatpush1.bf16.xpose.msra.mxu0 0
        %1277 = vmatprep.mubr.bf16.mxu0 0
        %1278 = vmatmul.mubr.bf16.gmra.mrb[0].mxu0 %v1240
        %v1279 = vpop.f32.mrb[0].mxu0
        %v1280 = vadd.f32 0.0, %v1279
        %v1281 = vpop.f32.mrb[0].mxu0
        %v1282 = vpop.f32.mrb[0].mxu0
        %v1283 = vpop.f32.mrb[0].mxu0
        %1284 = vdwg.mxu0
        %v1285 = vsel %vm787, -1e+09, %v1280
        %v1286 = vsel %vm839, %v1285, -inf
        %1287 = vmax.xlane.f32.xlu0 %v1286
        %v1288 = vpop.xlane.xlu0 %1287
        %v1289 = vsub.f32 %v1285, %v1288
        %v1290 = vmul.f32 %v1289, 1.442695
        %v1291 = vpow.pop %v1290
        %v1292 = vsel %vm839, %v1291, 0.0
        %1293 = vadd.xlane.f32.xlu0 %v1292
        %v1294 = vpop.xlane.xlu0 %1293
        %v1295 = vrcp.pop %v1294
        %v1296 = vmul.f32 %v1291, %v1295
        %v1297 = vpack.c.bf16 %v1296, %v1296
        %1298 = vrot.lane.b32.xlu0 %v790, 112
        %v1299 = vpop.permute.xlu0 %1298
        %v1301 = vsel %vm839, %v1297, 0
        %v1304 = vsel %vm855, %v1299, 0
        %1306 = vmatprep.subr.bf16.mxu0 0
        %1307 = vmatpush1.bf16.msra.mxu0 %v1304
        %1308 = vmatprep.subr.bf16.mxu0 0
        %1309 = vmatpush1.bf16.msra.mxu0 0
        %1310 = vmatprep.subr.bf16.mxu0 0
        %1311 = vmatpush1.bf16.msra.mxu0 0
        %1312 = vmatprep.subr.bf16.mxu0 0
        %1313 = vmatpush1.bf16.msra.mxu0 0
        %1314 = vmatprep.subr.bf16.mxu0 0
        %1315 = vmatpush1.bf16.msra.mxu0 0
        %1316 = vmatprep.subr.bf16.mxu0 0
        %1317 = vmatpush1.bf16.msra.mxu0 0
        %1318 = vmatprep.subr.bf16.mxu0 0
        %1319 = vmatpush1.bf16.msra.mxu0 0
        %1320 = vmatprep.subr.bf16.mxu0 0
        %1321 = vmatpush1.bf16.msra.mxu0 0
        %1322 = vmatprep.subr.bf16.mxu0 0
        %1323 = vmatpush1.bf16.msra.mxu0 0
        %1324 = vmatprep.subr.bf16.mxu0 0
        %1325 = vmatpush1.bf16.msra.mxu0 0
        %1326 = vmatprep.subr.bf16.mxu0 0
        %1327 = vmatpush1.bf16.msra.mxu0 0
        %1328 = vmatprep.subr.bf16.mxu0 0
        %1329 = vmatpush1.bf16.msra.mxu0 0
        %1330 = vmatprep.subr.bf16.mxu0 0
        %1331 = vmatpush1.bf16.msra.mxu0 0
        %1332 = vmatprep.subr.bf16.mxu0 0
        %1333 = vmatpush1.bf16.msra.mxu0 0
        %1334 = vmatprep.subr.bf16.mxu0 0
        %1335 = vmatpush1.bf16.msra.mxu0 0
        %1336 = vmatprep.subr.bf16.mxu0 0
        %1337 = vmatpush1.bf16.msra.mxu0 0
        %1338 = vmatprep.mubr.bf16.mxu0 0
        %1339 = vmatmul.mubr.bf16.gmra.mrb[0].mxu0 %v1301
        %v1340 = vpop.f32.mrb[0].mxu0
        %v1341 = vadd.f32 0.0, %v1340
        %v1342 = vpop.f32.mrb[0].mxu0
        %v1343 = vpop.f32.mrb[0].mxu0
        %v1344 = vpop.f32.mrb[0].mxu0
        %1345 = vdwg.mxu0
        %1346 = vrot.lane.b32.xlu0 %v788, 108
        %v1347 = vpop.permute.xlu0 %1346
        %1348 = vrot.lane.b32.xlu0 %v789, 108
        %v1349 = vpop.permute.xlu0 %1348
        %v1351 = vsel %vm791, %v1347, 0
        %v1354 = vsel %vm791, %v1349, 0
        %1356 = vmatprep.subr.bf16.mxu0 0
        %1357 = vmatpush1.bf16.xpose.msra.mxu0 %v1354
        %1358 = vmatprep.subr.bf16.mxu0 0
        %1359 = vmatpush1.bf16.xpose.msra.mxu0 0
        %1360 = vmatprep.subr.bf16.mxu0 0
        %1361 = vmatpush1.bf16.xpose.msra.mxu0 0
        %1362 = vmatprep.subr.bf16.mxu0 0
        %1363 = vmatpush1.bf16.xpose.msra.mxu0 0
        %1364 = vmatprep.subr.bf16.mxu0 0
        %1365 = vmatpush1.bf16.xpose.msra.mxu0 0
        %1366 = vmatprep.subr.bf16.mxu0 0
        %1367 = vmatpush1.bf16.xpose.msra.mxu0 0
        %1368 = vmatprep.subr.bf16.mxu0 0
        %1369 = vmatpush1.bf16.xpose.msra.mxu0 0
        %1370 = vmatprep.subr.bf16.mxu0 0
        %1371 = vmatpush1.bf16.xpose.msra.mxu0 0
        %1372 = vmatprep.subr.bf16.mxu0 0
        %1373 = vmatpush1.bf16.xpose.msra.mxu0 0
        %1374 = vmatprep.subr.bf16.mxu0 0
        %1375 = vmatpush1.bf16.xpose.msra.mxu0 0
        %1376 = vmatprep.subr.bf16.mxu0 0
        %1377 = vmatpush1.bf16.xpose.msra.mxu0 0
        %1378 = vmatprep.subr.bf16.mxu0 0
        %1379 = vmatpush1.bf16.xpose.msra.mxu0 0
        %1380 = vmatprep.subr.bf16.mxu0 0
        %1381 = vmatpush1.bf16.xpose.msra.mxu0 0
        %1382 = vmatprep.subr.bf16.mxu0 0
        %1383 = vmatpush1.bf16.xpose.msra.mxu0 0
        %1384 = vmatprep.subr.bf16.mxu0 0
        %1385 = vmatpush1.bf16.xpose.msra.mxu0 0
        %1386 = vmatprep.subr.bf16.mxu0 0
        %1387 = vmatpush1.bf16.xpose.msra.mxu0 0
        %1388 = vmatprep.mubr.bf16.mxu0 0
        %1389 = vmatmul.mubr.bf16.gmra.mrb[0].mxu0 %v1351
        %v1390 = vpop.f32.mrb[0].mxu0
        %v1391 = vadd.f32 0.0, %v1390
        %v1392 = vpop.f32.mrb[0].mxu0
        %v1393 = vpop.f32.mrb[0].mxu0
        %v1394 = vpop.f32.mrb[0].mxu0
        %1395 = vdwg.mxu0
        %v1396 = vsel %vm787, -1e+09, %v1391
        %v1397 = vsel %vm839, %v1396, -inf
        %1398 = vmax.xlane.f32.xlu0 %v1397
        %v1399 = vpop.xlane.xlu0 %1398
        %v1400 = vsub.f32 %v1396, %v1399
        %v1401 = vmul.f32 %v1400, 1.442695
        %v1402 = vpow.pop %v1401
        %v1403 = vsel %vm839, %v1402, 0.0
        %1404 = vadd.xlane.f32.xlu0 %v1403
        %v1405 = vpop.xlane.xlu0 %1404
        %v1406 = vrcp.pop %v1405
        %v1407 = vmul.f32 %v1402, %v1406
        %v1408 = vpack.c.bf16 %v1407, %v1407
        %1409 = vrot.lane.b32.xlu0 %v790, 108
        %v1410 = vpop.permute.xlu0 %1409
        %v1412 = vsel %vm839, %v1408, 0
        %v1415 = vsel %vm855, %v1410, 0
        %1417 = vmatprep.subr.bf16.mxu0 0
        %1418 = vmatpush1.bf16.msra.mxu0 %v1415
        %1419 = vmatprep.subr.bf16.mxu0 0
        %1420 = vmatpush1.bf16.msra.mxu0 0
        %1421 = vmatprep.subr.bf16.mxu0 0
        %1422 = vmatpush1.bf16.msra.mxu0 0
        %1423 = vmatprep.subr.bf16.mxu0 0
        %1424 = vmatpush1.bf16.msra.mxu0 0
        %1425 = vmatprep.subr.bf16.mxu0 0
        %1426 = vmatpush1.bf16.msra.mxu0 0
        %1427 = vmatprep.subr.bf16.mxu0 0
        %1428 = vmatpush1.bf16.msra.mxu0 0
        %1429 = vmatprep.subr.bf16.mxu0 0
        %1430 = vmatpush1.bf16.msra.mxu0 0
        %1431 = vmatprep.subr.bf16.mxu0 0
        %1432 = vmatpush1.bf16.msra.mxu0 0
        %1433 = vmatprep.subr.bf16.mxu0 0
        %1434 = vmatpush1.bf16.msra.mxu0 0
        %1435 = vmatprep.subr.bf16.mxu0 0
        %1436 = vmatpush1.bf16.msra.mxu0 0
        %1437 = vmatprep.subr.bf16.mxu0 0
        %1438 = vmatpush1.bf16.msra.mxu0 0
        %1439 = vmatprep.subr.bf16.mxu0 0
        %1440 = vmatpush1.bf16.msra.mxu0 0
        %1441 = vmatprep.subr.bf16.mxu0 0
        %1442 = vmatpush1.bf16.msra.mxu0 0
        %1443 = vmatprep.subr.bf16.mxu0 0
        %1444 = vmatpush1.bf16.msra.mxu0 0
        %1445 = vmatprep.subr.bf16.mxu0 0
        %1446 = vmatpush1.bf16.msra.mxu0 0
        %1447 = vmatprep.subr.bf16.mxu0 0
        %1448 = vmatpush1.bf16.msra.mxu0 0
        %1449 = vmatprep.mubr.bf16.mxu0 0
        %1450 = vmatmul.mubr.bf16.gmra.mrb[0].mxu0 %v1412
        %v1451 = vpop.f32.mrb[0].mxu0
        %v1452 = vadd.f32 0.0, %v1451
        %v1453 = vpop.f32.mrb[0].mxu0
        %v1454 = vpop.f32.mrb[0].mxu0
        %v1455 = vpop.f32.mrb[0].mxu0
        %1456 = vdwg.mxu0
        %1457 = vrot.lane.b32.xlu0 %v788, 104
        %v1458 = vpop.permute.xlu0 %1457
        %1459 = vrot.lane.b32.xlu0 %v789, 104
        %v1460 = vpop.permute.xlu0 %1459
        %v1462 = vsel %vm791, %v1458, 0
        %v1465 = vsel %vm791, %v1460, 0
        %1467 = vmatprep.subr.bf16.mxu0 0
        %1468 = vmatpush1.bf16.xpose.msra.mxu0 %v1465
        %1469 = vmatprep.subr.bf16.mxu0 0
        %1470 = vmatpush1.bf16.xpose.msra.mxu0 0
        %1471 = vmatprep.subr.bf16.mxu0 0
        %1472 = vmatpush1.bf16.xpose.msra.mxu0 0
        %1473 = vmatprep.subr.bf16.mxu0 0
        %1474 = vmatpush1.bf16.xpose.msra.mxu0 0
        %1475 = vmatprep.subr.bf16.mxu0 0
        %1476 = vmatpush1.bf16.xpose.msra.mxu0 0
        %1477 = vmatprep.subr.bf16.mxu0 0
        %1478 = vmatpush1.bf16.xpose.msra.mxu0 0
        %1479 = vmatprep.subr.bf16.mxu0 0
        %1480 = vmatpush1.bf16.xpose.msra.mxu0 0
        %1481 = vmatprep.subr.bf16.mxu0 0
        %1482 = vmatpush1.bf16.xpose.msra.mxu0 0
        %1483 = vmatprep.subr.bf16.mxu0 0
        %1484 = vmatpush1.bf16.xpose.msra.mxu0 0
        %1485 = vmatprep.subr.bf16.mxu0 0
        %1486 = vmatpush1.bf16.xpose.msra.mxu0 0
        %1487 = vmatprep.subr.bf16.mxu0 0
        %1488 = vmatpush1.bf16.xpose.msra.mxu0 0
        %1489 = vmatprep.subr.bf16.mxu0 0
        %1490 = vmatpush1.bf16.xpose.msra.mxu0 0
        %1491 = vmatprep.subr.bf16.mxu0 0
        %1492 = vmatpush1.bf16.xpose.msra.mxu0 0
        %1493 = vmatprep.subr.bf16.mxu0 0
        %1494 = vmatpush1.bf16.xpose.msra.mxu0 0
        %1495 = vmatprep.subr.bf16.mxu0 0
        %1496 = vmatpush1.bf16.xpose.msra.mxu0 0
        %1497 = vmatprep.subr.bf16.mxu0 0
        %1498 = vmatpush1.bf16.xpose.msra.mxu0 0
        %1499 = vmatprep.mubr.bf16.mxu0 0
        %1500 = vmatmul.mubr.bf16.gmra.mrb[0].mxu0 %v1462
        %v1501 = vpop.f32.mrb[0].mxu0
        %v1502 = vadd.f32 0.0, %v1501
        %v1503 = vpop.f32.mrb[0].mxu0
        %v1504 = vpop.f32.mrb[0].mxu0
        %v1505 = vpop.f32.mrb[0].mxu0
        %1506 = vdwg.mxu0
        %v1507 = vsel %vm787, -1e+09, %v1502
        %v1508 = vsel %vm839, %v1507, -inf
        %1509 = vmax.xlane.f32.xlu0 %v1508
        %v1510 = vpop.xlane.xlu0 %1509
        %v1511 = vsub.f32 %v1507, %v1510
        %v1512 = vmul.f32 %v1511, 1.442695
        %v1513 = vpow.pop %v1512
        %v1514 = vsel %vm839, %v1513, 0.0
        %1515 = vadd.xlane.f32.xlu0 %v1514
        %v1516 = vpop.xlane.xlu0 %1515
        %v1517 = vrcp.pop %v1516
        %v1518 = vmul.f32 %v1513, %v1517
        %v1519 = vpack.c.bf16 %v1518, %v1518
        %1520 = vrot.lane.b32.xlu0 %v790, 104
        %v1521 = vpop.permute.xlu0 %1520
        %v1523 = vsel %vm839, %v1519, 0
        %v1526 = vsel %vm855, %v1521, 0
        %1528 = vmatprep.subr.bf16.mxu0 0
        %1529 = vmatpush1.bf16.msra.mxu0 %v1526
        %1530 = vmatprep.subr.bf16.mxu0 0
        %1531 = vmatpush1.bf16.msra.mxu0 0
        %1532 = vmatprep.subr.bf16.mxu0 0
        %1533 = vmatpush1.bf16.msra.mxu0 0
        %1534 = vmatprep.subr.bf16.mxu0 0
        %1535 = vmatpush1.bf16.msra.mxu0 0
        %1536 = vmatprep.subr.bf16.mxu0 0
        %1537 = vmatpush1.bf16.msra.mxu0 0
        %1538 = vmatprep.subr.bf16.mxu0 0
        %1539 = vmatpush1.bf16.msra.mxu0 0
        %1540 = vmatprep.subr.bf16.mxu0 0
        %1541 = vmatpush1.bf16.msra.mxu0 0
        %1542 = vmatprep.subr.bf16.mxu0 0
        %1543 = vmatpush1.bf16.msra.mxu0 0
        %1544 = vmatprep.subr.bf16.mxu0 0
        %1545 = vmatpush1.bf16.msra.mxu0 0
        %1546 = vmatprep.subr.bf16.mxu0 0
        %1547 = vmatpush1.bf16.msra.mxu0 0
        %1548 = vmatprep.subr.bf16.mxu0 0
        %1549 = vmatpush1.bf16.msra.mxu0 0
        %1550 = vmatprep.subr.bf16.mxu0 0
        %1551 = vmatpush1.bf16.msra.mxu0 0
        %1552 = vmatprep.subr.bf16.mxu0 0
        %1553 = vmatpush1.bf16.msra.mxu0 0
        %1554 = vmatprep.subr.bf16.mxu0 0
        %1555 = vmatpush1.bf16.msra.mxu0 0
        %1556 = vmatprep.subr.bf16.mxu0 0
        %1557 = vmatpush1.bf16.msra.mxu0 0
        %1558 = vmatprep.subr.bf16.mxu0 0
        %1559 = vmatpush1.bf16.msra.mxu0 0
        %1560 = vmatprep.mubr.bf16.mxu0 0
        %1561 = vmatmul.mubr.bf16.gmra.mrb[0].mxu0 %v1523
        %v1562 = vpop.f32.mrb[0].mxu0
        %v1563 = vadd.f32 0.0, %v1562
        %v1564 = vpop.f32.mrb[0].mxu0
        %v1565 = vpop.f32.mrb[0].mxu0
        %v1566 = vpop.f32.mrb[0].mxu0
        %1567 = vdwg.mxu0
        %1568 = vrot.lane.b32.xlu0 %v788, 100
        %v1569 = vpop.permute.xlu0 %1568
        %1570 = vrot.lane.b32.xlu0 %v789, 100
        %v1571 = vpop.permute.xlu0 %1570
        %v1573 = vsel %vm791, %v1569, 0
        %v1576 = vsel %vm791, %v1571, 0
        %1578 = vmatprep.subr.bf16.mxu0 0
        %1579 = vmatpush1.bf16.xpose.msra.mxu0 %v1576
        %1580 = vmatprep.subr.bf16.mxu0 0
        %1581 = vmatpush1.bf16.xpose.msra.mxu0 0
        %1582 = vmatprep.subr.bf16.mxu0 0
        %1583 = vmatpush1.bf16.xpose.msra.mxu0 0
        %1584 = vmatprep.subr.bf16.mxu0 0
        %1585 = vmatpush1.bf16.xpose.msra.mxu0 0
        %1586 = vmatprep.subr.bf16.mxu0 0
        %1587 = vmatpush1.bf16.xpose.msra.mxu0 0
        %1588 = vmatprep.subr.bf16.mxu0 0
        %1589 = vmatpush1.bf16.xpose.msra.mxu0 0
        %1590 = vmatprep.subr.bf16.mxu0 0
        %1591 = vmatpush1.bf16.xpose.msra.mxu0 0
        %1592 = vmatprep.subr.bf16.mxu0 0
        %1593 = vmatpush1.bf16.xpose.msra.mxu0 0
        %1594 = vmatprep.subr.bf16.mxu0 0
        %1595 = vmatpush1.bf16.xpose.msra.mxu0 0
        %1596 = vmatprep.subr.bf16.mxu0 0
        %1597 = vmatpush1.bf16.xpose.msra.mxu0 0
        %1598 = vmatprep.subr.bf16.mxu0 0
        %1599 = vmatpush1.bf16.xpose.msra.mxu0 0
        %1600 = vmatprep.subr.bf16.mxu0 0
        %1601 = vmatpush1.bf16.xpose.msra.mxu0 0
        %1602 = vmatprep.subr.bf16.mxu0 0
        %1603 = vmatpush1.bf16.xpose.msra.mxu0 0
        %1604 = vmatprep.subr.bf16.mxu0 0
        %1605 = vmatpush1.bf16.xpose.msra.mxu0 0
        %1606 = vmatprep.subr.bf16.mxu0 0
        %1607 = vmatpush1.bf16.xpose.msra.mxu0 0
        %1608 = vmatprep.subr.bf16.mxu0 0
        %1609 = vmatpush1.bf16.xpose.msra.mxu0 0
        %1610 = vmatprep.mubr.bf16.mxu0 0
        %1611 = vmatmul.mubr.bf16.gmra.mrb[0].mxu0 %v1573
        %v1612 = vpop.f32.mrb[0].mxu0
        %v1613 = vadd.f32 0.0, %v1612
        %v1614 = vpop.f32.mrb[0].mxu0
        %v1615 = vpop.f32.mrb[0].mxu0
        %v1616 = vpop.f32.mrb[0].mxu0
        %1617 = vdwg.mxu0
        %v1618 = vsel %vm787, -1e+09, %v1613
        %v1619 = vsel %vm839, %v1618, -inf
        %1620 = vmax.xlane.f32.xlu0 %v1619
        %v1621 = vpop.xlane.xlu0 %1620
        %v1622 = vsub.f32 %v1618, %v1621
        %v1623 = vmul.f32 %v1622, 1.442695
        %v1624 = vpow.pop %v1623
        %v1625 = vsel %vm839, %v1624, 0.0
        %1626 = vadd.xlane.f32.xlu0 %v1625
        %v1627 = vpop.xlane.xlu0 %1626
        %v1628 = vrcp.pop %v1627
        %v1629 = vmul.f32 %v1624, %v1628
        %v1630 = vpack.c.bf16 %v1629, %v1629
        %1631 = vrot.lane.b32.xlu0 %v790, 100
        %v1632 = vpop.permute.xlu0 %1631
        %v1634 = vsel %vm839, %v1630, 0
        %v1637 = vsel %vm855, %v1632, 0
        %1639 = vmatprep.subr.bf16.mxu0 0
        %1640 = vmatpush1.bf16.msra.mxu0 %v1637
        %1641 = vmatprep.subr.bf16.mxu0 0
        %1642 = vmatpush1.bf16.msra.mxu0 0
        %1643 = vmatprep.subr.bf16.mxu0 0
        %1644 = vmatpush1.bf16.msra.mxu0 0
        %1645 = vmatprep.subr.bf16.mxu0 0
        %1646 = vmatpush1.bf16.msra.mxu0 0
        %1647 = vmatprep.subr.bf16.mxu0 0
        %1648 = vmatpush1.bf16.msra.mxu0 0
        %1649 = vmatprep.subr.bf16.mxu0 0
        %1650 = vmatpush1.bf16.msra.mxu0 0
        %1651 = vmatprep.subr.bf16.mxu0 0
        %1652 = vmatpush1.bf16.msra.mxu0 0
        %1653 = vmatprep.subr.bf16.mxu0 0
        %1654 = vmatpush1.bf16.msra.mxu0 0
        %1655 = vmatprep.subr.bf16.mxu0 0
        %1656 = vmatpush1.bf16.msra.mxu0 0
        %1657 = vmatprep.subr.bf16.mxu0 0
        %1658 = vmatpush1.bf16.msra.mxu0 0
        %1659 = vmatprep.subr.bf16.mxu0 0
        %1660 = vmatpush1.bf16.msra.mxu0 0
        %1661 = vmatprep.subr.bf16.mxu0 0
        %1662 = vmatpush1.bf16.msra.mxu0 0
        %1663 = vmatprep.subr.bf16.mxu0 0
        %1664 = vmatpush1.bf16.msra.mxu0 0
        %1665 = vmatprep.subr.bf16.mxu0 0
        %1666 = vmatpush1.bf16.msra.mxu0 0
        %1667 = vmatprep.subr.bf16.mxu0 0
        %1668 = vmatpush1.bf16.msra.mxu0 0
        %1669 = vmatprep.subr.bf16.mxu0 0
        %1670 = vmatpush1.bf16.msra.mxu0 0
        %1671 = vmatprep.mubr.bf16.mxu0 0
        %1672 = vmatmul.mubr.bf16.gmra.mrb[0].mxu0 %v1634
        %v1673 = vpop.f32.mrb[0].mxu0
        %v1674 = vadd.f32 0.0, %v1673
        %v1675 = vpop.f32.mrb[0].mxu0
        %v1676 = vpop.f32.mrb[0].mxu0
        %v1677 = vpop.f32.mrb[0].mxu0
        %1678 = vdwg.mxu0
        %1680 = vrot.lane.b32.xlu0 %v1008, 4
        %v1681 = vpop.permute.xlu0 %1680
        %1684 = vrot.lane.b32.xlu0 %v1119, 8
        %v1685 = vpop.permute.xlu0 %1684
        %1688 = vrot.lane.b32.xlu0 %v1230, 12
        %v1689 = vpop.permute.xlu0 %1688
        %1692 = vrot.lane.b32.xlu0 %v1341, 16
        %v1693 = vpop.permute.xlu0 %1692
        %1696 = vrot.lane.b32.xlu0 %v1452, 20
        %v1697 = vpop.permute.xlu0 %1696
        %1700 = vrot.lane.b32.xlu0 %v1563, 24
        %v1701 = vpop.permute.xlu0 %1700
        %1704 = vrot.lane.b32.xlu0 %v1674, 28
        %v1705 = vpop.permute.xlu0 %1704
        %v1707 = vsel %vm791, %v894, %v1681
        %v1708 = vsel %vm839, %v1707, %v1685
        %vm1709 = vcmask 97280
        %v1710 = vsel %vm1709, %v1708, %v1689
        %vm1711 = vcmask 130048
        %v1712 = vsel %vm1711, %v1710, %v1693
        %vm1713 = vcmask 162816
        %v1714 = vsel %vm1713, %v1712, %v1697
        %vm1715 = vcmask 195584
        %v1716 = vsel %vm1715, %v1714, %v1701
        %vm1717 = vcmask 228352
        %v1718 = vsel %vm1717, %v1716, %v1705
        %v1719 = vpack.c.bf16 %v1718, %v1718
        %v1720 = vld [vmem:[%s10] sm:$0xf]
        %v1721 = vld [vmem:[%s10 + $0x4] sm:$0xf]
        %v1722 = vld [vmem:[%s10 + $0x8] sm:$0xf]
        %v1723 = vld [vmem:[%s10 + $0xc] sm:$0xf]
        %v1724 = vld [vmem:[%s11] sm:$0x1]
        %v1726 = vlaneseq
        %v1727 = vshrl.u32 %v1726, 7
        %v1728 = vsub.s32 0, %v1727
        %v1729 = vrot.slane %v1724, %v1728
        %v1735 = vunpack.c.l.b16 %v1720
        %v1736 = vunpack.c.l.b16 %v1721
        %v1737 = vunpack.c.l.b16 %v1722
        %v1738 = vunpack.c.l.b16 %v1723
        %v1739 = vpack.c.b16 %v1736, %v1735
        %v1740 = vpack.c.b16 %v1738, %v1737
        %v1744 = vsel %vm608, %v1719, 0
        %1746 = vmatprep.subr.bf16.mxu0 0
        %1747 = vmatpush1.bf16.msra.mxu0 %v1739
        %1748 = vmatprep.subr.bf16.mxu0 0
        %1749 = vmatpush1.bf16.msra.mxu0 %v1740
        %1750 = vmatprep.subr.bf16.mxu0 0
        %1751 = vmatpush1.bf16.msra.mxu0 0
        %1752 = vmatprep.subr.bf16.mxu0 0
        %1753 = vmatpush1.bf16.msra.mxu0 0
        %1754 = vmatprep.subr.bf16.mxu0 0
        %1755 = vmatpush1.bf16.msra.mxu0 0
        %1756 = vmatprep.subr.bf16.mxu0 0
        %1757 = vmatpush1.bf16.msra.mxu0 0
        %1758 = vmatprep.subr.bf16.mxu0 0
        %1759 = vmatpush1.bf16.msra.mxu0 0
        %1760 = vmatprep.subr.bf16.mxu0 0
        %1761 = vmatpush1.bf16.msra.mxu0 0
        %1762 = vmatprep.subr.bf16.mxu0 0
        %1763 = vmatpush1.bf16.msra.mxu0 0
        %1764 = vmatprep.subr.bf16.mxu0 0
        %1765 = vmatpush1.bf16.msra.mxu0 0
        %1766 = vmatprep.subr.bf16.mxu0 0
        %1767 = vmatpush1.bf16.msra.mxu0 0
        %1768 = vmatprep.subr.bf16.mxu0 0
        %1769 = vmatpush1.bf16.msra.mxu0 0
        %1770 = vmatprep.subr.bf16.mxu0 0
        %1771 = vmatpush1.bf16.msra.mxu0 0
        %1772 = vmatprep.subr.bf16.mxu0 0
        %1773 = vmatpush1.bf16.msra.mxu0 0
        %1774 = vmatprep.subr.bf16.mxu0 0
        %1775 = vmatpush1.bf16.msra.mxu0 0
        %1776 = vmatprep.subr.bf16.mxu0 0
        %1777 = vmatpush1.bf16.msra.mxu0 0
        %1778 = vmatprep.mubr.bf16.mxu0 0
        %1779 = vmatmul.mubr.bf16.gmra.mrb[0].mxu0 %v1744
        %v1780 = vpop.f32.mrb[0].mxu0
        %v1781 = vadd.f32 %v1729, %v1780
        %v1782 = vpop.f32.mrb[0].mxu0
        %v1783 = vpop.f32.mrb[0].mxu0
        %v1784 = vpop.f32.mrb[0].mxu0
        %1785 = vdwg.mxu0
        %1786 = vst.msk [vmem:[%s577] sm:$0xff] %vm608, %v1781
        %s1787 = sand.u32 %s316, 1
        %s1788 = scalar_lea.sflag [#allocation4], %s1787
        %s1789 = sand.u32 %s316, 1
        %s1790 = smul.addr %s1789, 8
        %s1791 = scalar_lea.vmem [#allocation14], %s1790
        // Predicated region
        $region97: #{tpu_custom_call.1} parent=67 // pred_check
          %p1792 = pneg %p326
        $region98: #{tpu_custom_call.1} parent=67 // pred_check_branch
          %1794 = sbr.rel (%p1792) target = $region100
        $region99: #{tpu_custom_call.1} parent=67 // pred_region
          %s1796 = ssub.s32 128, 128
          %1797 = vsyncadd %s1788, %s1796
          %s1798 = smul.addr %s36, 128
          %s1799 = scalar_lea.hbm %s12, %s1798
          %s1801 = sshll.u32 %s1791, 4
          %s1802 = int_to_ptr.vmem [resolvable:$true] %s1801
          %1804 = dma.vmem_to_hbm [thread:$0]  %s1802, 128, %s1799, %s1788
        $region100: #{tpu_custom_call.1} parent=67 // pred_fallthru
          _
      $region68: #{tpu_custom_call.1} parent=5 // pred_fallthru
        _
      %p1805 = scmp.le.s32.totalorder 2, %s31
      // Predicated region
      $region101: #{tpu_custom_call.1} parent=5 // pred_check
        %p1806 = pneg %p1805
      $region102: #{tpu_custom_call.1} parent=5 // pred_check_branch
        %1808 = sbr.rel (%p1806) target = $region104
      $region103: #{tpu_custom_call.1} parent=5 // pred_region
        %s1809 = ssub.s32 %s31, 2
        // Predicated region
        $region105: #{tpu_custom_call.1} parent=103 // pred_check
          %p1810 = pneg %p332
        $region106: #{tpu_custom_call.1} parent=103 // pred_check_branch
          %1812 = sbr.rel (%p1810) target = $region108
        $region107: #{tpu_custom_call.1} parent=103 // pred_region
          %s1813 = sand.u32 %s317, 1
          %s1814 = scalar_lea.sflag [#allocation4], %s1813
          %s1815 = sand.u32 %s317, 1
          %s1816 = smul.addr %s1815, 8
          %s1817 = scalar_lea.vmem [#allocation14], %s1816
          %1818 = dma.done %s1814, 128
        $region108: #{tpu_custom_call.1} parent=103 // pred_fallthru
          _
      $region104: #{tpu_custom_call.1} parent=5 // pred_fallthru
        _
    $region6: #{tpu_custom_call.1} parent=1 // loop_footer
      %s35 = sadd.s32 1, %s31
    $region7: #{tpu_custom_call.1} parent=1 // loop_footer_branch
      %30 = sbr.rel target = $region3
    $region8: #{tpu_custom_call.1} parent=1 // loop_exit
      _
    %1819 = vsyncpa [#allocation3], 1
    %s1820 = scalar_lea.sflag [#allocation3], 1
    %1821 = vsyncpa %s1820, 1
    %1822 = vsyncpa [#allocation6], 1
    %s1823 = scalar_lea.sflag [#allocation6], 1
    %1824 = vsyncpa %s1823, 1
    %1825 = vsyncpa [#allocation9], 1
    %s1826 = scalar_lea.sflag [#allocation9], 1
    %1827 = vsyncpa %s1826, 1
    %1828 = vsyncpa [#allocation12], 1
    %1829 = vsyncpa [#allocation4], 1
    %s1830 = scalar_lea.sflag [#allocation4], 1
    %1831 = vsyncpa %s1830, 1

</llo_original>
